<compile_context>
chip_gen: v7x
topology: tpu7x:2x2x1
jax: 0.10.0
libtpu: 0.0.40
codegen_flags: <defaults>
</compile_context>

<pallas_src>
import functools

import jax
import jax.numpy as jnp
from jax import lax
from jax.experimental import pallas as pl
from jax.experimental.pallas import tpu as pltpu


def _cov_kernel(x2_ref, cov_ref, *, ways, B2, C, M):
    # x2_ref : VMEM (ways, B2, C, HW)  all support features, single grid step
    # cov_ref: VMEM (ways*C, C) f32    stacked per-class covariance matrices
    inv_m = 1.0 / M
    inv_m1 = 1.0 / (M - 1)
    for j in range(ways):                               # ways, B2 small & static
        # Per-channel mean over all shots and spatial positions of class j.
        ssum = jnp.zeros((C, 1), jnp.float32)
        for b in range(B2):
            xb = x2_ref[j, b].astype(jnp.float32)                 # (C, HW)
            ssum = ssum + jnp.sum(xb, axis=1, keepdims=True)
        mean = ssum * inv_m                                       # (C, 1)
        # Cov_j = sum_b (x_b - mean)(x_b - mean)^T / (M - 1)   (per-shot MXU dots)
        acc = jnp.zeros((C, C), jnp.float32)
        for b in range(B2):
            sc = x2_ref[j, b].astype(jnp.float32) - mean          # (C, HW)
            acc = acc + lax.dot_general(
                sc, sc, dimension_numbers=(((1,), (1,)), ((), ())),
                preferred_element_type=jnp.float32)
        cov_ref[pl.ds(j * C, C), :] = acc * inv_m1


def _sim_kernel(cov_ref, q_ref, o_ref, qn_ref, t_ref, *, ways, C, HW, q_block):
    # cov_ref: VMEM (ways*C, C) f32         stacked covariances (resident every step)
    # q_ref  : VMEM (1, C, q_block*HW)      this step's queries, channel x (query-major spatial)
    # o_ref  : VMEM (1, q_block, ways*HW)   lane-dense output slab
    # qn_ref : VMEM (C, q_block*HW) f32     scratch: L2-normalized queries
    # t_ref  : VMEM (ways*C, q_block*HW) f32 scratch: stacked Cov @ qn slab
    # Per-query, per-channel L2 normalization (rsqrt goes to the EUP slot).
    for qi in range(q_block):
        seg = q_ref[0, :, pl.ds(qi * HW, HW)].astype(jnp.float32)     # (C, HW)
        ss = jnp.sum(seg * seg, axis=1, keepdims=True)                # (C, 1)
        qn_ref[:, pl.ds(qi * HW, HW)] = seg * lax.rsqrt(ss)
    # One stacked MXU matmul over all classes and all queries of this block.
    t_ref[...] = jnp.dot(cov_ref[...], qn_ref[...],
                         preferred_element_type=jnp.float32)          # (ways*C, QHW)
    # diag(Q^T Cov_j Q)[p] = sum_c qn[c, p] * (Cov_j @ qn)[c, p]
    for j in range(ways):
        tj = t_ref[pl.ds(j * C, C), :]                                # (C, QHW)
        rowj = jnp.sum(qn_ref[...] * tj, axis=0, keepdims=True)       # (1, QHW)
        for qi in range(q_block):
            o_ref[0, pl.ds(qi, 1), pl.ds(j * HW, HW)] = (
                rowj[:, qi * HW:(qi + 1) * HW].astype(o_ref.dtype))


def _pick_q_block(B1, HW, lanes_target=512):
    """Queries per sim grid step: lane-dense blocks, but keep >=2 steps for v7x."""
    cap = max(1, lanes_target // max(HW, 1))
    if B1 >= 2:
        cap = min(cap, B1 // 2)
    cap = max(cap, 1)
    qb = 1
    for d in range(1, cap + 1):
        if B1 % d == 0:
            qb = d
    return qb


def covablock_forward(x1, x2):
    """CovaBlock forward.

    x1: (B1, C, h, w)        query features.
    x2: (ways, B2, C, h, w)  support features, one group per class (stacked
                             equivalent of the PyTorch list of (B2,C,h,w) tensors).
    Returns (B1, 1, ways*h*w), matching the PyTorch module.
    """
    B1, C, h, w = x1.shape
    ways, B2, Cs, hs, ws = x2.shape
    assert (C, h, w) == (Cs, hs, ws)
    HW = h * w
    M = B2 * HW

    # ---- Stage 1: covariances, single grid step, no HBM transpose of x2.
    # TODO(synk): if ways*B2*C*HW grows past a few MiB, tile the shot/spatial
    # reduction with an extra "arbitrary" grid axis + accumulating scratch instead
    # of taking the full support block in VMEM (v7x has only 64 MiB physical VMEM).
    x2_r = x2.reshape(ways, B2, C, HW)
    cov = pl.pallas_call(
        functools.partial(_cov_kernel, ways=ways, B2=B2, C=C, M=M),
        out_shape=jax.ShapeDtypeStruct((ways * C, C), jnp.float32),
        grid=(1,),
        in_specs=[pl.BlockSpec((ways, B2, C, HW), lambda i: (0, 0, 0, 0))],
        out_specs=pl.BlockSpec((ways * C, C), lambda i: (0, 0)),
        compiler_params=pltpu.CompilerParams(
            dimension_semantics=("arbitrary",)),
    )(x2_r)

    # ---- Stage 2: similarities. q_block queries per grid step, channel-major
    # layout so each step's query block is (C, q_block*HW) lane-dense.
    q_block = _pick_q_block(B1, HW)
    nb = B1 // q_block
    q_all = (x1.reshape(nb, q_block, C, HW)
               .transpose(0, 2, 1, 3)
               .reshape(nb, C, q_block * HW))

    sim = pl.pallas_call(
        functools.partial(_sim_kernel, ways=ways, C=C, HW=HW, q_block=q_block),
        out_shape=jax.ShapeDtypeStruct((nb, q_block, ways * HW), x1.dtype),
        grid=(nb,),
        in_specs=[
            pl.BlockSpec((ways * C, C), lambda i: (0, 0)),            # resident covariances
            pl.BlockSpec((1, C, q_block * HW), lambda i: (i, 0, 0)),  # this step's queries
        ],
        out_specs=pl.BlockSpec((1, q_block, ways * HW), lambda i: (i, 0, 0)),
        scratch_shapes=[
            pltpu.VMEM((C, q_block * HW), jnp.float32),        # qn
            pltpu.VMEM((ways * C, q_block * HW), jnp.float32), # stacked Cov @ qn slab
        ],
        compiler_params=pltpu.CompilerParams(
            dimension_semantics=("parallel",)),
    )(cov, q_all)

    return sim.reshape(B1, 1, ways * HW)


def covablock_reference(x1, x2):
    """Pure-JAX reference matching the PyTorch module."""
    ways, B2, C, h, w = x2.shape
    B1 = x1.shape[0]
    HW = h * w
    s = jnp.transpose(x2, (0, 2, 1, 3, 4)).reshape(ways, C, B2 * HW)
    s = s - jnp.mean(s, axis=2, keepdims=True)
    cov = jnp.einsum("kcm,kdm->kcd", s, s, precision="highest") / (B2 * HW - 1)
    qn = x1.reshape(B1, C, HW)
    qn = qn / jnp.linalg.norm(qn, axis=2, keepdims=True)
    sim = jnp.einsum("icp,kcd,idp->ikp", qn, cov, qn, precision="highest")
    return sim.reshape(B1, 1, ways * HW)


if __name__ == "__main__":
    key = jax.random.PRNGKey(0)
    k1, k2 = jax.random.split(key)

    B1, ways, B2, C, h, w = 2, 3, 4, 64, 16, 16
    x1 = jax.random.normal(k1, (B1, C, h, w), dtype=jnp.float32)
    x2 = jax.random.normal(k2, (ways, B2, C, h, w), dtype=jnp.float32)

    out = jax.block_until_ready(covablock_forward(x1, x2))
    ref = jax.block_until_ready(covablock_reference(x1, x2))

    assert out.shape == (B1, 1, ways * h * w)
    assert jnp.allclose(out, ref, atol=1e-4, rtol=1e-4), (
        float(jnp.max(jnp.abs(out - ref))))
    print("KERNEL_OK")
</pallas_src>

<mosaic_0001>
module attributes {stable_mosaic.version = 11 : i64} {
  func.func @_cov_kernel(%arg0: i32, %arg1: memref<3x4x64x256xf32, #tpu.memory_space<vmem>>, %arg2: memref<192x64xf32, #tpu.memory_space<vmem>>) attributes {dimension_semantics = [#tpu.dimension_semantics<arbitrary>], iteration_bounds = array<i64: 1>, scalar_prefetch = 0 : i64, scratch_operands = 0 : i64, tpu.core_type = #tpu.core_type<tc>, window_params = [{pipeline_mode = #tpu.pipeline_mode<synchronous>, transform_indices = @transform_0, window_bounds = array<i64: 3, 4, 64, 256>}, {pipeline_mode = #tpu.pipeline_mode<synchronous>, transform_indices = @transform_1, window_bounds = array<i64: 192, 64>}]} {
    %cst = arith.constant 0.000000e+00 : f32
    %0 = vector.broadcast %cst : f32 to vector<64x1xf32>
    %c0 = arith.constant 0 : index
    %c0_0 = arith.constant 0 : index
    %c0_1 = arith.constant 0 : index
    %c0_2 = arith.constant 0 : index
    %1 = vector.load %arg1[%c0, %c0_0, %c0_1, %c0_2] : memref<3x4x64x256xf32, #tpu.memory_space<vmem>>, vector<1x1x64x256xf32>
    %2 = vector.shape_cast %1 : vector<1x1x64x256xf32> to vector<64x256xf32>
    %cst_3 = arith.constant dense<0.000000e+00> : vector<64xf32>
    %3 = vector.multi_reduction <add>, %2, %cst_3 [1] : vector<64x256xf32> to vector<64xf32>
    %4 = vector.shape_cast %3 : vector<64xf32> to vector<64x1xf32>
    %5 = arith.addf %0, %4 : vector<64x1xf32>
    %c0_4 = arith.constant 0 : index
    %c1 = arith.constant 1 : index
    %c0_5 = arith.constant 0 : index
    %c0_6 = arith.constant 0 : index
    %6 = vector.load %arg1[%c0_4, %c1, %c0_5, %c0_6] : memref<3x4x64x256xf32, #tpu.memory_space<vmem>>, vector<1x1x64x256xf32>
    %7 = vector.shape_cast %6 : vector<1x1x64x256xf32> to vector<64x256xf32>
    %cst_7 = arith.constant dense<0.000000e+00> : vector<64xf32>
    %8 = vector.multi_reduction <add>, %7, %cst_7 [1] : vector<64x256xf32> to vector<64xf32>
    %9 = vector.shape_cast %8 : vector<64xf32> to vector<64x1xf32>
    %10 = arith.addf %5, %9 : vector<64x1xf32>
    %c0_8 = arith.constant 0 : index
    %c2 = arith.constant 2 : index
    %c0_9 = arith.constant 0 : index
    %c0_10 = arith.constant 0 : index
    %11 = vector.load %arg1[%c0_8, %c2, %c0_9, %c0_10] : memref<3x4x64x256xf32, #tpu.memory_space<vmem>>, vector<1x1x64x256xf32>
    %12 = vector.shape_cast %11 : vector<1x1x64x256xf32> to vector<64x256xf32>
    %cst_11 = arith.constant dense<0.000000e+00> : vector<64xf32>
    %13 = vector.multi_reduction <add>, %12, %cst_11 [1] : vector<64x256xf32> to vector<64xf32>
    %14 = vector.shape_cast %13 : vector<64xf32> to vector<64x1xf32>
    %15 = arith.addf %10, %14 : vector<64x1xf32>
    %c0_12 = arith.constant 0 : index
    %c3 = arith.constant 3 : index
    %c0_13 = arith.constant 0 : index
    %c0_14 = arith.constant 0 : index
    %16 = vector.load %arg1[%c0_12, %c3, %c0_13, %c0_14] : memref<3x4x64x256xf32, #tpu.memory_space<vmem>>, vector<1x1x64x256xf32>
    %17 = vector.shape_cast %16 : vector<1x1x64x256xf32> to vector<64x256xf32>
    %cst_15 = arith.constant dense<0.000000e+00> : vector<64xf32>
    %18 = vector.multi_reduction <add>, %17, %cst_15 [1] : vector<64x256xf32> to vector<64xf32>
    %19 = vector.shape_cast %18 : vector<64xf32> to vector<64x1xf32>
    %20 = arith.addf %15, %19 : vector<64x1xf32>
    %cst_16 = arith.constant 9.765625E-4 : f32
    %21 = vector.broadcast %cst_16 : f32 to vector<64x1xf32>
    %22 = arith.mulf %20, %21 : vector<64x1xf32>
    %cst_17 = arith.constant 0.000000e+00 : f32
    %23 = vector.broadcast %cst_17 : f32 to vector<64x64xf32>
    %c0_18 = arith.constant 0 : index
    %c0_19 = arith.constant 0 : index
    %c0_20 = arith.constant 0 : index
    %c0_21 = arith.constant 0 : index
    %24 = vector.load %arg1[%c0_18, %c0_19, %c0_20, %c0_21] : memref<3x4x64x256xf32, #tpu.memory_space<vmem>>, vector<1x1x64x256xf32>
    %25 = vector.shape_cast %24 : vector<1x1x64x256xf32> to vector<64x256xf32>
    %26 = vector.broadcast %22 : vector<64x1xf32> to vector<64x256xf32>
    %27 = arith.subf %25, %26 : vector<64x256xf32>
    %cst_22 = arith.constant dense<0.000000e+00> : vector<64x64xf32>
    %28 = tpu.matmul %27, %27, %cst_22 {dimension_numbers = #tpu.dot_dimension_numbers<[1], [1], [0], [0], [0, 0, 1, 0], [], []>} : vector<64x256xf32>, vector<64x256xf32>, vector<64x64xf32> -> vector<64x64xf32>
    %29 = arith.addf %23, %28 : vector<64x64xf32>
    %c0_23 = arith.constant 0 : index
    %c1_24 = arith.constant 1 : index
    %c0_25 = arith.constant 0 : index
    %c0_26 = arith.constant 0 : index
    %30 = vector.load %arg1[%c0_23, %c1_24, %c0_25, %c0_26] : memref<3x4x64x256xf32, #tpu.memory_space<vmem>>, vector<1x1x64x256xf32>
    %31 = vector.shape_cast %30 : vector<1x1x64x256xf32> to vector<64x256xf32>
    %32 = vector.broadcast %22 : vector<64x1xf32> to vector<64x256xf32>
    %33 = arith.subf %31, %32 : vector<64x256xf32>
    %cst_27 = arith.constant dense<0.000000e+00> : vector<64x64xf32>
    %34 = tpu.matmul %33, %33, %cst_27 {dimension_numbers = #tpu.dot_dimension_numbers<[1], [1], [0], [0], [0, 0, 1, 0], [], []>} : vector<64x256xf32>, vector<64x256xf32>, vector<64x64xf32> -> vector<64x64xf32>
    %35 = arith.addf %29, %34 : vector<64x64xf32>
    %c0_28 = arith.constant 0 : index
    %c2_29 = arith.constant 2 : index
    %c0_30 = arith.constant 0 : index
    %c0_31 = arith.constant 0 : index
    %36 = vector.load %arg1[%c0_28, %c2_29, %c0_30, %c0_31] : memref<3x4x64x256xf32, #tpu.memory_space<vmem>>, vector<1x1x64x256xf32>
    %37 = vector.shape_cast %36 : vector<1x1x64x256xf32> to vector<64x256xf32>
    %38 = vector.broadcast %22 : vector<64x1xf32> to vector<64x256xf32>
    %39 = arith.subf %37, %38 : vector<64x256xf32>
    %cst_32 = arith.constant dense<0.000000e+00> : vector<64x64xf32>
    %40 = tpu.matmul %39, %39, %cst_32 {dimension_numbers = #tpu.dot_dimension_numbers<[1], [1], [0], [0], [0, 0, 1, 0], [], []>} : vector<64x256xf32>, vector<64x256xf32>, vector<64x64xf32> -> vector<64x64xf32>
    %41 = arith.addf %35, %40 : vector<64x64xf32>
    %c0_33 = arith.constant 0 : index
    %c3_34 = arith.constant 3 : index
    %c0_35 = arith.constant 0 : index
    %c0_36 = arith.constant 0 : index
    %42 = vector.load %arg1[%c0_33, %c3_34, %c0_35, %c0_36] : memref<3x4x64x256xf32, #tpu.memory_space<vmem>>, vector<1x1x64x256xf32>
    %43 = vector.shape_cast %42 : vector<1x1x64x256xf32> to vector<64x256xf32>
    %44 = vector.broadcast %22 : vector<64x1xf32> to vector<64x256xf32>
    %45 = arith.subf %43, %44 : vector<64x256xf32>
    %cst_37 = arith.constant dense<0.000000e+00> : vector<64x64xf32>
    %46 = tpu.matmul %45, %45, %cst_37 {dimension_numbers = #tpu.dot_dimension_numbers<[1], [1], [0], [0], [0, 0, 1, 0], [], []>} : vector<64x256xf32>, vector<64x256xf32>, vector<64x64xf32> -> vector<64x64xf32>
    %47 = arith.addf %41, %46 : vector<64x64xf32>
    %cst_38 = arith.constant 9.77517105E-4 : f32
    %48 = vector.broadcast %cst_38 : f32 to vector<64x64xf32>
    %49 = arith.mulf %47, %48 : vector<64x64xf32>
    %c0_39 = arith.constant 0 : index
    %c0_40 = arith.constant 0 : index
    %50 = vector.load %arg2[%c0_39, %c0_40] : memref<192x64xf32, #tpu.memory_space<vmem>>, vector<64x64xf32>
    tpu.vector_store %arg2[%c0_39, %c0_40], %49 {strides = array<i32>} : memref<192x64xf32, #tpu.memory_space<vmem>>, vector<64x64xf32>,
    %cst_41 = arith.constant 0.000000e+00 : f32
    %51 = vector.broadcast %cst_41 : f32 to vector<64x1xf32>
    %c1_42 = arith.constant 1 : index
    %c0_43 = arith.constant 0 : index
    %c0_44 = arith.constant 0 : index
    %c0_45 = arith.constant 0 : index
    %52 = vector.load %arg1[%c1_42, %c0_43, %c0_44, %c0_45] : memref<3x4x64x256xf32, #tpu.memory_space<vmem>>, vector<1x1x64x256xf32>
    %53 = vector.shape_cast %52 : vector<1x1x64x256xf32> to vector<64x256xf32>
    %cst_46 = arith.constant dense<0.000000e+00> : vector<64xf32>
    %54 = vector.multi_reduction <add>, %53, %cst_46 [1] : vector<64x256xf32> to vector<64xf32>
    %55 = vector.shape_cast %54 : vector<64xf32> to vector<64x1xf32>
    %56 = arith.addf %51, %55 : vector<64x1xf32>
    %c1_47 = arith.constant 1 : index
    %c1_48 = arith.constant 1 : index
    %c0_49 = arith.constant 0 : index
    %c0_50 = arith.constant 0 : index
    %57 = vector.load %arg1[%c1_47, %c1_48, %c0_49, %c0_50] : memref<3x4x64x256xf32, #tpu.memory_space<vmem>>, vector<1x1x64x256xf32>
    %58 = vector.shape_cast %57 : vector<1x1x64x256xf32> to vector<64x256xf32>
    %cst_51 = arith.constant dense<0.000000e+00> : vector<64xf32>
    %59 = vector.multi_reduction <add>, %58, %cst_51 [1] : vector<64x256xf32> to vector<64xf32>
    %60 = vector.shape_cast %59 : vector<64xf32> to vector<64x1xf32>
    %61 = arith.addf %56, %60 : vector<64x1xf32>
    %c1_52 = arith.constant 1 : index
    %c2_53 = arith.constant 2 : index
    %c0_54 = arith.constant 0 : index
    %c0_55 = arith.constant 0 : index
    %62 = vector.load %arg1[%c1_52, %c2_53, %c0_54, %c0_55] : memref<3x4x64x256xf32, #tpu.memory_space<vmem>>, vector<1x1x64x256xf32>
    %63 = vector.shape_cast %62 : vector<1x1x64x256xf32> to vector<64x256xf32>
    %cst_56 = arith.constant dense<0.000000e+00> : vector<64xf32>
    %64 = vector.multi_reduction <add>, %63, %cst_56 [1] : vector<64x256xf32> to vector<64xf32>
    %65 = vector.shape_cast %64 : vector<64xf32> to vector<64x1xf32>
    %66 = arith.addf %61, %65 : vector<64x1xf32>
    %c1_57 = arith.constant 1 : index
    %c3_58 = arith.constant 3 : index
    %c0_59 = arith.constant 0 : index
    %c0_60 = arith.constant 0 : index
    %67 = vector.load %arg1[%c1_57, %c3_58, %c0_59, %c0_60] : memref<3x4x64x256xf32, #tpu.memory_space<vmem>>, vector<1x1x64x256xf32>
    %68 = vector.shape_cast %67 : vector<1x1x64x256xf32> to vector<64x256xf32>
    %cst_61 = arith.constant dense<0.000000e+00> : vector<64xf32>
    %69 = vector.multi_reduction <add>, %68, %cst_61 [1] : vector<64x256xf32> to vector<64xf32>
    %70 = vector.shape_cast %69 : vector<64xf32> to vector<64x1xf32>
    %71 = arith.addf %66, %70 : vector<64x1xf32>
    %cst_62 = arith.constant 9.765625E-4 : f32
    %72 = vector.broadcast %cst_62 : f32 to vector<64x1xf32>
    %73 = arith.mulf %71, %72 : vector<64x1xf32>
    %cst_63 = arith.constant 0.000000e+00 : f32
    %74 = vector.broadcast %cst_63 : f32 to vector<64x64xf32>
    %c1_64 = arith.constant 1 : index
    %c0_65 = arith.constant 0 : index
    %c0_66 = arith.constant 0 : index
    %c0_67 = arith.constant 0 : index
    %75 = vector.load %arg1[%c1_64, %c0_65, %c0_66, %c0_67] : memref<3x4x64x256xf32, #tpu.memory_space<vmem>>, vector<1x1x64x256xf32>
    %76 = vector.shape_cast %75 : vector<1x1x64x256xf32> to vector<64x256xf32>
    %77 = vector.broadcast %73 : vector<64x1xf32> to vector<64x256xf32>
    %78 = arith.subf %76, %77 : vector<64x256xf32>
    %cst_68 = arith.constant dense<0.000000e+00> : vector<64x64xf32>
    %79 = tpu.matmul %78, %78, %cst_68 {dimension_numbers = #tpu.dot_dimension_numbers<[1], [1], [0], [0], [0, 0, 1, 0], [], []>} : vector<64x256xf32>, vector<64x256xf32>, vector<64x64xf32> -> vector<64x64xf32>
    %80 = arith.addf %74, %79 : vector<64x64xf32>
    %c1_69 = arith.constant 1 : index
    %c1_70 = arith.constant 1 : index
    %c0_71 = arith.constant 0 : index
    %c0_72 = arith.constant 0 : index
    %81 = vector.load %arg1[%c1_69, %c1_70, %c0_71, %c0_72] : memref<3x4x64x256xf32, #tpu.memory_space<vmem>>, vector<1x1x64x256xf32>
    %82 = vector.shape_cast %81 : vector<1x1x64x256xf32> to vector<64x256xf32>
    %83 = vector.broadcast %73 : vector<64x1xf32> to vector<64x256xf32>
    %84 = arith.subf %82, %83 : vector<64x256xf32>
    %cst_73 = arith.constant dense<0.000000e+00> : vector<64x64xf32>
    %85 = tpu.matmul %84, %84, %cst_73 {dimension_numbers = #tpu.dot_dimension_numbers<[1], [1], [0], [0], [0, 0, 1, 0], [], []>} : vector<64x256xf32>, vector<64x256xf32>, vector<64x64xf32> -> vector<64x64xf32>
    %86 = arith.addf %80, %85 : vector<64x64xf32>
    %c1_74 = arith.constant 1 : index
    %c2_75 = arith.constant 2 : index
    %c0_76 = arith.constant 0 : index
    %c0_77 = arith.constant 0 : index
    %87 = vector.load %arg1[%c1_74, %c2_75, %c0_76, %c0_77] : memref<3x4x64x256xf32, #tpu.memory_space<vmem>>, vector<1x1x64x256xf32>
    %88 = vector.shape_cast %87 : vector<1x1x64x256xf32> to vector<64x256xf32>
    %89 = vector.broadcast %73 : vector<64x1xf32> to vector<64x256xf32>
    %90 = arith.subf %88, %89 : vector<64x256xf32>
    %cst_78 = arith.constant dense<0.000000e+00> : vector<64x64xf32>
    %91 = tpu.matmul %90, %90, %cst_78 {dimension_numbers = #tpu.dot_dimension_numbers<[1], [1], [0], [0], [0, 0, 1, 0], [], []>} : vector<64x256xf32>, vector<64x256xf32>, vector<64x64xf32> -> vector<64x64xf32>
    %92 = arith.addf %86, %91 : vector<64x64xf32>
    %c1_79 = arith.constant 1 : index
    %c3_80 = arith.constant 3 : index
    %c0_81 = arith.constant 0 : index
    %c0_82 = arith.constant 0 : index
    %93 = vector.load %arg1[%c1_79, %c3_80, %c0_81, %c0_82] : memref<3x4x64x256xf32, #tpu.memory_space<vmem>>, vector<1x1x64x256xf32>
    %94 = vector.shape_cast %93 : vector<1x1x64x256xf32> to vector<64x256xf32>
    %95 = vector.broadcast %73 : vector<64x1xf32> to vector<64x256xf32>
    %96 = arith.subf %94, %95 : vector<64x256xf32>
    %cst_83 = arith.constant dense<0.000000e+00> : vector<64x64xf32>
    %97 = tpu.matmul %96, %96, %cst_83 {dimension_numbers = #tpu.dot_dimension_numbers<[1], [1], [0], [0], [0, 0, 1, 0], [], []>} : vector<64x256xf32>, vector<64x256xf32>, vector<64x64xf32> -> vector<64x64xf32>
    %98 = arith.addf %92, %97 : vector<64x64xf32>
    %cst_84 = arith.constant 9.77517105E-4 : f32
    %99 = vector.broadcast %cst_84 : f32 to vector<64x64xf32>
    %100 = arith.mulf %98, %99 : vector<64x64xf32>
    %c64 = arith.constant 64 : index
    %c0_85 = arith.constant 0 : index
    %101 = vector.load %arg2[%c64, %c0_85] : memref<192x64xf32, #tpu.memory_space<vmem>>, vector<64x64xf32>
    tpu.vector_store %arg2[%c64, %c0_85], %100 {strides = array<i32>} : memref<192x64xf32, #tpu.memory_space<vmem>>, vector<64x64xf32>,
    %cst_86 = arith.constant 0.000000e+00 : f32
    %102 = vector.broadcast %cst_86 : f32 to vector<64x1xf32>
    %c2_87 = arith.constant 2 : index
    %c0_88 = arith.constant 0 : index
    %c0_89 = arith.constant 0 : index
    %c0_90 = arith.constant 0 : index
    %103 = vector.load %arg1[%c2_87, %c0_88, %c0_89, %c0_90] : memref<3x4x64x256xf32, #tpu.memory_space<vmem>>, vector<1x1x64x256xf32>
    %104 = vector.shape_cast %103 : vector<1x1x64x256xf32> to vector<64x256xf32>
    %cst_91 = arith.constant dense<0.000000e+00> : vector<64xf32>
    %105 = vector.multi_reduction <add>, %104, %cst_91 [1] : vector<64x256xf32> to vector<64xf32>
    %106 = vector.shape_cast %105 : vector<64xf32> to vector<64x1xf32>
    %107 = arith.addf %102, %106 : vector<64x1xf32>
    %c2_92 = arith.constant 2 : index
    %c1_93 = arith.constant 1 : index
    %c0_94 = arith.constant 0 : index
    %c0_95 = arith.constant 0 : index
    %108 = vector.load %arg1[%c2_92, %c1_93, %c0_94, %c0_95] : memref<3x4x64x256xf32, #tpu.memory_space<vmem>>, vector<1x1x64x256xf32>
    %109 = vector.shape_cast %108 : vector<1x1x64x256xf32> to vector<64x256xf32>
    %cst_96 = arith.constant dense<0.000000e+00> : vector<64xf32>
    %110 = vector.multi_reduction <add>, %109, %cst_96 [1] : vector<64x256xf32> to vector<64xf32>
    %111 = vector.shape_cast %110 : vector<64xf32> to vector<64x1xf32>
    %112 = arith.addf %107, %111 : vector<64x1xf32>
    %c2_97 = arith.constant 2 : index
    %c2_98 = arith.constant 2 : index
    %c0_99 = arith.constant 0 : index
    %c0_100 = arith.constant 0 : index
    %113 = vector.load %arg1[%c2_97, %c2_98, %c0_99, %c0_100] : memref<3x4x64x256xf32, #tpu.memory_space<vmem>>, vector<1x1x64x256xf32>
    %114 = vector.shape_cast %113 : vector<1x1x64x256xf32> to vector<64x256xf32>
    %cst_101 = arith.constant dense<0.000000e+00> : vector<64xf32>
    %115 = vector.multi_reduction <add>, %114, %cst_101 [1] : vector<64x256xf32> to vector<64xf32>
    %116 = vector.shape_cast %115 : vector<64xf32> to vector<64x1xf32>
    %117 = arith.addf %112, %116 : vector<64x1xf32>
    %c2_102 = arith.constant 2 : index
    %c3_103 = arith.constant 3 : index
    %c0_104 = arith.constant 0 : index
    %c0_105 = arith.constant 0 : index
    %118 = vector.load %arg1[%c2_102, %c3_103, %c0_104, %c0_105] : memref<3x4x64x256xf32, #tpu.memory_space<vmem>>, vector<1x1x64x256xf32>
    %119 = vector.shape_cast %118 : vector<1x1x64x256xf32> to vector<64x256xf32>
    %cst_106 = arith.constant dense<0.000000e+00> : vector<64xf32>
    %120 = vector.multi_reduction <add>, %119, %cst_106 [1] : vector<64x256xf32> to vector<64xf32>
    %121 = vector.shape_cast %120 : vector<64xf32> to vector<64x1xf32>
    %122 = arith.addf %117, %121 : vector<64x1xf32>
    %cst_107 = arith.constant 9.765625E-4 : f32
    %123 = vector.broadcast %cst_107 : f32 to vector<64x1xf32>
    %124 = arith.mulf %122, %123 : vector<64x1xf32>
    %cst_108 = arith.constant 0.000000e+00 : f32
    %125 = vector.broadcast %cst_108 : f32 to vector<64x64xf32>
    %c2_109 = arith.constant 2 : index
    %c0_110 = arith.constant 0 : index
    %c0_111 = arith.constant 0 : index
    %c0_112 = arith.constant 0 : index
    %126 = vector.load %arg1[%c2_109, %c0_110, %c0_111, %c0_112] : memref<3x4x64x256xf32, #tpu.memory_space<vmem>>, vector<1x1x64x256xf32>
    %127 = vector.shape_cast %126 : vector<1x1x64x256xf32> to vector<64x256xf32>
    %128 = vector.broadcast %124 : vector<64x1xf32> to vector<64x256xf32>
    %129 = arith.subf %127, %128 : vector<64x256xf32>
    %cst_113 = arith.constant dense<0.000000e+00> : vector<64x64xf32>
    %130 = tpu.matmul %129, %129, %cst_113 {dimension_numbers = #tpu.dot_dimension_numbers<[1], [1], [0], [0], [0, 0, 1, 0], [], []>} : vector<64x256xf32>, vector<64x256xf32>, vector<64x64xf32> -> vector<64x64xf32>
    %131 = arith.addf %125, %130 : vector<64x64xf32>
    %c2_114 = arith.constant 2 : index
    %c1_115 = arith.constant 1 : index
    %c0_116 = arith.constant 0 : index
    %c0_117 = arith.constant 0 : index
    %132 = vector.load %arg1[%c2_114, %c1_115, %c0_116, %c0_117] : memref<3x4x64x256xf32, #tpu.memory_space<vmem>>, vector<1x1x64x256xf32>
    %133 = vector.shape_cast %132 : vector<1x1x64x256xf32> to vector<64x256xf32>
    %134 = vector.broadcast %124 : vector<64x1xf32> to vector<64x256xf32>
    %135 = arith.subf %133, %134 : vector<64x256xf32>
    %cst_118 = arith.constant dense<0.000000e+00> : vector<64x64xf32>
    %136 = tpu.matmul %135, %135, %cst_118 {dimension_numbers = #tpu.dot_dimension_numbers<[1], [1], [0], [0], [0, 0, 1, 0], [], []>} : vector<64x256xf32>, vector<64x256xf32>, vector<64x64xf32> -> vector<64x64xf32>
    %137 = arith.addf %131, %136 : vector<64x64xf32>
    %c2_119 = arith.constant 2 : index
    %c2_120 = arith.constant 2 : index
    %c0_121 = arith.constant 0 : index
    %c0_122 = arith.constant 0 : index
    %138 = vector.load %arg1[%c2_119, %c2_120, %c0_121, %c0_122] : memref<3x4x64x256xf32, #tpu.memory_space<vmem>>, vector<1x1x64x256xf32>
    %139 = vector.shape_cast %138 : vector<1x1x64x256xf32> to vector<64x256xf32>
    %140 = vector.broadcast %124 : vector<64x1xf32> to vector<64x256xf32>
    %141 = arith.subf %139, %140 : vector<64x256xf32>
    %cst_123 = arith.constant dense<0.000000e+00> : vector<64x64xf32>
    %142 = tpu.matmul %141, %141, %cst_123 {dimension_numbers = #tpu.dot_dimension_numbers<[1], [1], [0], [0], [0, 0, 1, 0], [], []>} : vector<64x256xf32>, vector<64x256xf32>, vector<64x64xf32> -> vector<64x64xf32>
    %143 = arith.addf %137, %142 : vector<64x64xf32>
    %c2_124 = arith.constant 2 : index
    %c3_125 = arith.constant 3 : index
    %c0_126 = arith.constant 0 : index
    %c0_127 = arith.constant 0 : index
    %144 = vector.load %arg1[%c2_124, %c3_125, %c0_126, %c0_127] : memref<3x4x64x256xf32, #tpu.memory_space<vmem>>, vector<1x1x64x256xf32>
    %145 = vector.shape_cast %144 : vector<1x1x64x256xf32> to vector<64x256xf32>
    %146 = vector.broadcast %124 : vector<64x1xf32> to vector<64x256xf32>
    %147 = arith.subf %145, %146 : vector<64x256xf32>
    %cst_128 = arith.constant dense<0.000000e+00> : vector<64x64xf32>
    %148 = tpu.matmul %147, %147, %cst_128 {dimension_numbers = #tpu.dot_dimension_numbers<[1], [1], [0], [0], [0, 0, 1, 0], [], []>} : vector<64x256xf32>, vector<64x256xf32>, vector<64x64xf32> -> vector<64x64xf32>
    %149 = arith.addf %143, %148 : vector<64x64xf32>
    %cst_129 = arith.constant 9.77517105E-4 : f32
    %150 = vector.broadcast %cst_129 : f32 to vector<64x64xf32>
    %151 = arith.mulf %149, %150 : vector<64x64xf32>
    %c128 = arith.constant 128 : index
    %c0_130 = arith.constant 0 : index
    %152 = vector.load %arg2[%c128, %c0_130] : memref<192x64xf32, #tpu.memory_space<vmem>>, vector<64x64xf32>
    tpu.vector_store %arg2[%c128, %c0_130], %151 {strides = array<i32>} : memref<192x64xf32, #tpu.memory_space<vmem>>, vector<64x64xf32>,
    return
  }
  func.func @transform_0(%arg0: i32) -> (i32, i32, i32, i32) {
    %c0_i32 = arith.constant 0 : i32
    %c0_i32_0 = arith.constant 0 : i32
    %c0_i32_1 = arith.constant 0 : i32
    %c0_i32_2 = arith.constant 0 : i32
    %c0_i32_3 = arith.constant 0 : i32
    return %c0_i32, %c0_i32_0, %c0_i32_1, %c0_i32_2 : i32, i32, i32, i32
  }
  func.func @transform_1(%arg0: i32) -> (i32, i32) {
    %c0_i32 = arith.constant 0 : i32
    %c0_i32_0 = arith.constant 0 : i32
    %c0_i32_1 = arith.constant 0 : i32
    return %c0_i32, %c0_i32_0 : i32, i32
  }
}

</mosaic_0001>

<llo_original>
// kernel: tpu_custom_call.1
$region0: #{tpu_custom_call.1}
  #allocation0 [shape = 'u32[]', space=smem, size = 0x4, offset = 0x4, fixed_abs, tag = 'smem constant byte address 0x4 - core index']
  #allocation1 [shape = 'u32[144,128]{1,0:T(1,128)}', space=vmem, size = 0x12000, scoped, tag = 'internal scratch']
  %s0 = inlined_call_operand.hbm [shape: f32[3,4,64,256], index: 0, kind: input, shape index: {}]
  %s1 = inlined_call_operand.vmem [shape: f32[192,64], index: 1, kind: output, shape index: {}]
  %s2 = sld [smem:[#allocation0]]
  $region18: #{tpu_custom_call.1} parent=0
    _
  %s4 = ssub.s32 1, %s2
  %s5 = scalar_select 0, %s4, %s2
  $region1: #{tpu_custom_call.1} parent=0
    #allocation2 [shape = 'u8[786432]{0}', space=vmem, size = 0xc0000, scoped, tag = 'input window, operand 0, single buffered']
    #allocation3 [shape = 's32[1]{0}', space=sflag, size = 0x4, scoped, tag = 'scoped memory for tpu_custom_call.1']
    %6 = vsyncpa [#allocation3], 0
    // Predicated region
    $region2: #{tpu_custom_call.1} parent=1 // pred_check
      _
    $region3: #{tpu_custom_call.1} parent=1 // pred_check_branch
      %8 = sbr.rel (0) target = $region5
    $region4: #{tpu_custom_call.1} parent=1 // pred_region
      %s10 = ssub.s32 24576, 24576
      %11 = vsyncadd [#allocation3], %s10
      %s12 = sshll.u32 [#allocation2], 4
      %s13 = int_to_ptr.vmem [resolvable:$true] %s12
      %18 = dma.hbm_to_vmem [thread:$0]  %s0, 24576, %s13, [#allocation3], 256, 256, 16
    $region5: #{tpu_custom_call.1} parent=1 // pred_fallthru
      _
    // Predicated region
    $region6: #{tpu_custom_call.1} parent=1 // pred_check
      _
    $region7: #{tpu_custom_call.1} parent=1 // pred_check_branch
      %20 = sbr.rel (0) target = $region9
    $region8: #{tpu_custom_call.1} parent=1 // pred_region
      %21 = dma.done [#allocation3], 24576
    $region9: #{tpu_custom_call.1} parent=1 // pred_fallthru
      _
    %v22 = vld [vmem:[#allocation2] sm:$0xff]
    %v23 = vld [vmem:[#allocation2 + $0x8] sm:$0xff]
    %v24 = vld [vmem:[#allocation2 + $0x10] sm:$0xff]
    %v25 = vld [vmem:[#allocation2 + $0x18] sm:$0xff]
    %v26 = vld [vmem:[#allocation2 + $0x20] sm:$0xff]
    %v27 = vld [vmem:[#allocation2 + $0x28] sm:$0xff]
    %v28 = vld [vmem:[#allocation2 + $0x30] sm:$0xff]
    %v29 = vld [vmem:[#allocation2 + $0x38] sm:$0xff]
    %v30 = vld [vmem:[#allocation2 + $0x40] sm:$0xff]
    %v31 = vld [vmem:[#allocation2 + $0x48] sm:$0xff]
    %v32 = vld [vmem:[#allocation2 + $0x50] sm:$0xff]
    %v33 = vld [vmem:[#allocation2 + $0x58] sm:$0xff]
    %v34 = vld [vmem:[#allocation2 + $0x60] sm:$0xff]
    %v35 = vld [vmem:[#allocation2 + $0x68] sm:$0xff]
    %v36 = vld [vmem:[#allocation2 + $0x70] sm:$0xff]
    %v37 = vld [vmem:[#allocation2 + $0x78] sm:$0xff]
    %v38 = vadd.f32 %v22, %v23
    %39 = vadd.xlane.f32.xlu0 %v38
    %v40 = vpop.xlane.xlu0 %39
    %v41 = vadd.f32 %v24, %v25
    %42 = vadd.xlane.f32.xlu0 %v41
    %v43 = vpop.xlane.xlu0 %42
    %v44 = vadd.f32 %v26, %v27
    %45 = vadd.xlane.f32.xlu0 %v44
    %v46 = vpop.xlane.xlu0 %45
    %v47 = vadd.f32 %v28, %v29
    %48 = vadd.xlane.f32.xlu0 %v47
    %v49 = vpop.xlane.xlu0 %48
    %v50 = vadd.f32 %v30, %v31
    %51 = vadd.xlane.f32.xlu0 %v50
    %v52 = vpop.xlane.xlu0 %51
    %v53 = vadd.f32 %v32, %v33
    %54 = vadd.xlane.f32.xlu0 %v53
    %v55 = vpop.xlane.xlu0 %54
    %v56 = vadd.f32 %v34, %v35
    %57 = vadd.xlane.f32.xlu0 %v56
    %v58 = vpop.xlane.xlu0 %57
    %v59 = vadd.f32 %v36, %v37
    %60 = vadd.xlane.f32.xlu0 %v59
    %v61 = vpop.xlane.xlu0 %60
    %v62 = vadd.f32 %v40, 0.0
    %v63 = vadd.f32 %v43, 0.0
    %v64 = vadd.f32 %v46, 0.0
    %v65 = vadd.f32 %v49, 0.0
    %v66 = vadd.f32 %v52, 0.0
    %v67 = vadd.f32 %v55, 0.0
    %v68 = vadd.f32 %v58, 0.0
    %v69 = vadd.f32 %v61, 0.0
    %s70 = scalar_lea.vmem [#allocation2], 128
    %v71 = vld [vmem:[%s70] sm:$0xff]
    %v72 = vld [vmem:[%s70 + $0x8] sm:$0xff]
    %v73 = vld [vmem:[%s70 + $0x10] sm:$0xff]
    %v74 = vld [vmem:[%s70 + $0x18] sm:$0xff]
    %v75 = vld [vmem:[%s70 + $0x20] sm:$0xff]
    %v76 = vld [vmem:[%s70 + $0x28] sm:$0xff]
    %v77 = vld [vmem:[%s70 + $0x30] sm:$0xff]
    %v78 = vld [vmem:[%s70 + $0x38] sm:$0xff]
    %v79 = vld [vmem:[%s70 + $0x40] sm:$0xff]
    %v80 = vld [vmem:[%s70 + $0x48] sm:$0xff]
    %v81 = vld [vmem:[%s70 + $0x50] sm:$0xff]
    %v82 = vld [vmem:[%s70 + $0x58] sm:$0xff]
    %v83 = vld [vmem:[%s70 + $0x60] sm:$0xff]
    %v84 = vld [vmem:[%s70 + $0x68] sm:$0xff]
    %v85 = vld [vmem:[%s70 + $0x70] sm:$0xff]
    %v86 = vld [vmem:[%s70 + $0x78] sm:$0xff]
    %v87 = vadd.f32 %v71, %v72
    %88 = vadd.xlane.f32.xlu0 %v87
    %v89 = vpop.xlane.xlu0 %88
    %v90 = vadd.f32 %v73, %v74
    %91 = vadd.xlane.f32.xlu0 %v90
    %v92 = vpop.xlane.xlu0 %91
    %v93 = vadd.f32 %v75, %v76
    %94 = vadd.xlane.f32.xlu0 %v93
    %v95 = vpop.xlane.xlu0 %94
    %v96 = vadd.f32 %v77, %v78
    %97 = vadd.xlane.f32.xlu0 %v96
    %v98 = vpop.xlane.xlu0 %97
    %v99 = vadd.f32 %v79, %v80
    %100 = vadd.xlane.f32.xlu0 %v99
    %v101 = vpop.xlane.xlu0 %100
    %v102 = vadd.f32 %v81, %v82
    %103 = vadd.xlane.f32.xlu0 %v102
    %v104 = vpop.xlane.xlu0 %103
    %v105 = vadd.f32 %v83, %v84
    %106 = vadd.xlane.f32.xlu0 %v105
    %v107 = vpop.xlane.xlu0 %106
    %v108 = vadd.f32 %v85, %v86
    %109 = vadd.xlane.f32.xlu0 %v108
    %v110 = vpop.xlane.xlu0 %109
    %v111 = vadd.f32 %v62, %v89
    %v112 = vadd.f32 %v63, %v92
    %v113 = vadd.f32 %v64, %v95
    %v114 = vadd.f32 %v65, %v98
    %v115 = vadd.f32 %v66, %v101
    %v116 = vadd.f32 %v67, %v104
    %v117 = vadd.f32 %v68, %v107
    %v118 = vadd.f32 %v69, %v110
    %s119 = scalar_lea.vmem [#allocation2], 256
    %v120 = vld [vmem:[%s119] sm:$0xff]
    %v121 = vld [vmem:[%s119 + $0x8] sm:$0xff]
    %v122 = vld [vmem:[%s119 + $0x10] sm:$0xff]
    %v123 = vld [vmem:[%s119 + $0x18] sm:$0xff]
    %v124 = vld [vmem:[%s119 + $0x20] sm:$0xff]
    %v125 = vld [vmem:[%s119 + $0x28] sm:$0xff]
    %v126 = vld [vmem:[%s119 + $0x30] sm:$0xff]
    %v127 = vld [vmem:[%s119 + $0x38] sm:$0xff]
    %v128 = vld [vmem:[%s119 + $0x40] sm:$0xff]
    %v129 = vld [vmem:[%s119 + $0x48] sm:$0xff]
    %v130 = vld [vmem:[%s119 + $0x50] sm:$0xff]
    %v131 = vld [vmem:[%s119 + $0x58] sm:$0xff]
    %v132 = vld [vmem:[%s119 + $0x60] sm:$0xff]
    %v133 = vld [vmem:[%s119 + $0x68] sm:$0xff]
    %v134 = vld [vmem:[%s119 + $0x70] sm:$0xff]
    %v135 = vld [vmem:[%s119 + $0x78] sm:$0xff]
    %v136 = vadd.f32 %v120, %v121
    %137 = vadd.xlane.f32.xlu0 %v136
    %v138 = vpop.xlane.xlu0 %137
    %v139 = vadd.f32 %v122, %v123
    %140 = vadd.xlane.f32.xlu0 %v139
    %v141 = vpop.xlane.xlu0 %140
    %v142 = vadd.f32 %v124, %v125
    %143 = vadd.xlane.f32.xlu0 %v142
    %v144 = vpop.xlane.xlu0 %143
    %v145 = vadd.f32 %v126, %v127
    %146 = vadd.xlane.f32.xlu0 %v145
    %v147 = vpop.xlane.xlu0 %146
    %v148 = vadd.f32 %v128, %v129
    %149 = vadd.xlane.f32.xlu0 %v148
    %v150 = vpop.xlane.xlu0 %149
    %v151 = vadd.f32 %v130, %v131
    %152 = vadd.xlane.f32.xlu0 %v151
    %v153 = vpop.xlane.xlu0 %152
    %v154 = vadd.f32 %v132, %v133
    %155 = vadd.xlane.f32.xlu0 %v154
    %v156 = vpop.xlane.xlu0 %155
    %v157 = vadd.f32 %v134, %v135
    %158 = vadd.xlane.f32.xlu0 %v157
    %v159 = vpop.xlane.xlu0 %158
    %v160 = vadd.f32 %v111, %v138
    %v161 = vadd.f32 %v112, %v141
    %v162 = vadd.f32 %v113, %v144
    %v163 = vadd.f32 %v114, %v147
    %v164 = vadd.f32 %v115, %v150
    %v165 = vadd.f32 %v116, %v153
    %v166 = vadd.f32 %v117, %v156
    %v167 = vadd.f32 %v118, %v159
    %s168 = scalar_lea.vmem [#allocation2], 384
    %v169 = vld [vmem:[%s168] sm:$0xff]
    %v170 = vld [vmem:[%s168 + $0x8] sm:$0xff]
    %v171 = vld [vmem:[%s168 + $0x10] sm:$0xff]
    %v172 = vld [vmem:[%s168 + $0x18] sm:$0xff]
    %v173 = vld [vmem:[%s168 + $0x20] sm:$0xff]
    %v174 = vld [vmem:[%s168 + $0x28] sm:$0xff]
    %v175 = vld [vmem:[%s168 + $0x30] sm:$0xff]
    %v176 = vld [vmem:[%s168 + $0x38] sm:$0xff]
    %v177 = vld [vmem:[%s168 + $0x40] sm:$0xff]
    %v178 = vld [vmem:[%s168 + $0x48] sm:$0xff]
    %v179 = vld [vmem:[%s168 + $0x50] sm:$0xff]
    %v180 = vld [vmem:[%s168 + $0x58] sm:$0xff]
    %v181 = vld [vmem:[%s168 + $0x60] sm:$0xff]
    %v182 = vld [vmem:[%s168 + $0x68] sm:$0xff]
    %v183 = vld [vmem:[%s168 + $0x70] sm:$0xff]
    %v184 = vld [vmem:[%s168 + $0x78] sm:$0xff]
    %v185 = vadd.f32 %v169, %v170
    %186 = vadd.xlane.f32.xlu0 %v185
    %v187 = vpop.xlane.xlu0 %186
    %v188 = vadd.f32 %v171, %v172
    %189 = vadd.xlane.f32.xlu0 %v188
    %v190 = vpop.xlane.xlu0 %189
    %v191 = vadd.f32 %v173, %v174
    %192 = vadd.xlane.f32.xlu0 %v191
    %v193 = vpop.xlane.xlu0 %192
    %v194 = vadd.f32 %v175, %v176
    %195 = vadd.xlane.f32.xlu0 %v194
    %v196 = vpop.xlane.xlu0 %195
    %v197 = vadd.f32 %v177, %v178
    %198 = vadd.xlane.f32.xlu0 %v197
    %v199 = vpop.xlane.xlu0 %198
    %v200 = vadd.f32 %v179, %v180
    %201 = vadd.xlane.f32.xlu0 %v200
    %v202 = vpop.xlane.xlu0 %201
    %v203 = vadd.f32 %v181, %v182
    %204 = vadd.xlane.f32.xlu0 %v203
    %v205 = vpop.xlane.xlu0 %204
    %v206 = vadd.f32 %v183, %v184
    %207 = vadd.xlane.f32.xlu0 %v206
    %v208 = vpop.xlane.xlu0 %207
    %v209 = vadd.f32 %v160, %v187
    %v210 = vadd.f32 %v161, %v190
    %v211 = vadd.f32 %v162, %v193
    %v212 = vadd.f32 %v163, %v196
    %v213 = vadd.f32 %v164, %v199
    %v214 = vadd.f32 %v165, %v202
    %v215 = vadd.f32 %v166, %v205
    %v216 = vadd.f32 %v167, %v208
    %v217 = vmul.f32 %v209, 0.0009765625
    %v218 = vmul.f32 %v210, 0.0009765625
    %v219 = vmul.f32 %v211, 0.0009765625
    %v220 = vmul.f32 %v212, 0.0009765625
    %v221 = vmul.f32 %v213, 0.0009765625
    %v222 = vmul.f32 %v214, 0.0009765625
    %v223 = vmul.f32 %v215, 0.0009765625
    %v224 = vmul.f32 %v216, 0.0009765625
    %v225 = vsub.f32 %v22, %v217
    %v226 = vsub.f32 %v23, %v217
    %v227 = vsub.f32 %v24, %v218
    %v228 = vsub.f32 %v25, %v218
    %v229 = vsub.f32 %v26, %v219
    %v230 = vsub.f32 %v27, %v219
    %v231 = vsub.f32 %v28, %v220
    %v232 = vsub.f32 %v29, %v220
    %v233 = vsub.f32 %v30, %v221
    %v234 = vsub.f32 %v31, %v221
    %v235 = vsub.f32 %v32, %v222
    %v236 = vsub.f32 %v33, %v222
    %v237 = vsub.f32 %v34, %v223
    %v238 = vsub.f32 %v35, %v223
    %v239 = vsub.f32 %v36, %v224
    %v240 = vsub.f32 %v37, %v224
    %v241 = vsub.f32 %v71, %v217
    %v242 = vsub.f32 %v72, %v217
    %v243 = vsub.f32 %v73, %v218
    %v244 = vsub.f32 %v74, %v218
    %v245 = vsub.f32 %v75, %v219
    %v246 = vsub.f32 %v76, %v219
    %v247 = vsub.f32 %v77, %v220
    %v248 = vsub.f32 %v78, %v220
    %v249 = vsub.f32 %v79, %v221
    %v250 = vsub.f32 %v80, %v221
    %v251 = vsub.f32 %v81, %v222
    %v252 = vsub.f32 %v82, %v222
    %v253 = vsub.f32 %v83, %v223
    %v254 = vsub.f32 %v84, %v223
    %v255 = vsub.f32 %v85, %v224
    %v256 = vsub.f32 %v86, %v224
    %257 = vmatprep.subr.mxu0 %v242
    %258 = vmatpush1.xpose.msra.mxu0 %v241
    %259 = vmatprep.subr.mxu0 %v244
    %260 = vmatpush1.xpose.msra.mxu0 %v243
    %261 = vmatprep.subr.mxu0 %v246
    %262 = vmatpush1.xpose.msra.mxu0 %v245
    %263 = vmatprep.subr.mxu0 %v248
    %264 = vmatpush1.xpose.msra.mxu0 %v247
    %265 = vmatprep.subr.mxu0 %v250
    %266 = vmatpush1.xpose.msra.mxu0 %v249
    %267 = vmatprep.subr.mxu0 %v252
    %268 = vmatpush1.xpose.msra.mxu0 %v251
    %269 = vmatprep.subr.mxu0 %v254
    %270 = vmatpush1.xpose.msra.mxu0 %v253
    %271 = vmatprep.subr.mxu0 %v256
    %272 = vmatpush1.xpose.msra.mxu0 %v255
    %273 = vmatprep.subr.mxu0 0.0
    %274 = vmatpush1.xpose.msra.mxu0 0.0
    %275 = vmatprep.subr.mxu0 0.0
    %276 = vmatpush1.xpose.msra.mxu0 0.0
    %277 = vmatprep.subr.mxu0 0.0
    %278 = vmatpush1.xpose.msra.mxu0 0.0
    %279 = vmatprep.subr.mxu0 0.0
    %280 = vmatpush1.xpose.msra.mxu0 0.0
    %281 = vmatprep.subr.mxu0 0.0
    %282 = vmatpush1.xpose.msra.mxu0 0.0
    %283 = vmatprep.subr.mxu0 0.0
    %284 = vmatpush1.xpose.msra.mxu0 0.0
    %285 = vmatprep.subr.mxu0 0.0
    %286 = vmatpush1.xpose.msra.mxu0 0.0
    %287 = vmatprep.subr.mxu0 0.0
    %288 = vmatpush1.xpose.msra.mxu0 0.0
    %289 = vmatprep.subr.mxu0 0.0
    %290 = vmatpush1.xpose.msra.mxu0 0.0
    %291 = vmatprep.subr.mxu0 0.0
    %292 = vmatpush1.xpose.msra.mxu0 0.0
    %293 = vmatprep.subr.mxu0 0.0
    %294 = vmatpush1.xpose.msra.mxu0 0.0
    %295 = vmatprep.subr.mxu0 0.0
    %296 = vmatpush1.xpose.msra.mxu0 0.0
    %297 = vmatprep.subr.mxu0 0.0
    %298 = vmatpush1.xpose.msra.mxu0 0.0
    %299 = vmatprep.subr.mxu0 0.0
    %300 = vmatpush1.xpose.msra.mxu0 0.0
    %301 = vmatprep.subr.mxu0 0.0
    %302 = vmatpush1.xpose.msra.mxu0 0.0
    %303 = vmatprep.subr.mxu0 0.0
    %304 = vmatpush1.xpose.msra.mxu0 0.0
    %305 = vmatprep.subr.mxu0 0.0
    %306 = vmatpush1.xpose.msra.mxu0 0.0
    %307 = vmatprep.subr.mxu0 0.0
    %308 = vmatpush1.xpose.msra.mxu0 0.0
    %309 = vmatprep.subr.mxu0 0.0
    %310 = vmatpush1.xpose.msra.mxu0 0.0
    %311 = vmatprep.subr.mxu0 0.0
    %312 = vmatpush1.xpose.msra.mxu0 0.0
    %313 = vmatprep.subr.mxu0 0.0
    %314 = vmatpush1.xpose.msra.mxu0 0.0
    %315 = vmatprep.subr.mxu0 0.0
    %316 = vmatpush1.xpose.msra.mxu0 0.0
    %317 = vmatprep.subr.mxu0 0.0
    %318 = vmatpush1.xpose.msra.mxu0 0.0
    %319 = vmatprep.subr.mxu0 0.0
    %320 = vmatpush1.xpose.msra.mxu0 0.0
    %321 = vmatprep.mubr.f32.mxu0 %v242
    %322 = vmatmul.mubr.f32.gmra.mrb[0].mxu0 %v241
    %v323 = vpop.f32.mrb[0].mxu0
    %v324 = vadd.f32 0.0, %v323
    %v325 = vpop.f32.mrb[0].mxu0
    %326 = vmatprep.mubr.f32.mxu0 %v244
    %327 = vmatmul.mubr.f32.gmra.mrb[0].mxu0 %v243
    %v328 = vpop.f32.mrb[0].mxu0
    %v329 = vadd.f32 0.0, %v328
    %v330 = vpop.f32.mrb[0].mxu0
    %331 = vmatprep.mubr.f32.mxu0 %v246
    %332 = vmatmul.mubr.f32.gmra.mrb[0].mxu0 %v245
    %v333 = vpop.f32.mrb[0].mxu0
    %v334 = vadd.f32 0.0, %v333
    %v335 = vpop.f32.mrb[0].mxu0
    %336 = vmatprep.mubr.f32.mxu0 %v248
    %337 = vmatmul.mubr.f32.gmra.mrb[0].mxu0 %v247
    %v338 = vpop.f32.mrb[0].mxu0
    %v339 = vadd.f32 0.0, %v338
    %v340 = vpop.f32.mrb[0].mxu0
    %341 = vmatprep.mubr.f32.mxu0 %v250
    %342 = vmatmul.mubr.f32.gmra.mrb[0].mxu0 %v249
    %v343 = vpop.f32.mrb[0].mxu0
    %v344 = vadd.f32 0.0, %v343
    %v345 = vpop.f32.mrb[0].mxu0
    %346 = vmatprep.mubr.f32.mxu0 %v252
    %347 = vmatmul.mubr.f32.gmra.mrb[0].mxu0 %v251
    %v348 = vpop.f32.mrb[0].mxu0
    %v349 = vadd.f32 0.0, %v348
    %v350 = vpop.f32.mrb[0].mxu0
    %351 = vmatprep.mubr.f32.mxu0 %v254
    %352 = vmatmul.mubr.f32.gmra.mrb[0].mxu0 %v253
    %v353 = vpop.f32.mrb[0].mxu0
    %v354 = vadd.f32 0.0, %v353
    %v355 = vpop.f32.mrb[0].mxu0
    %356 = vmatprep.mubr.f32.mxu0 %v256
    %357 = vmatmul.mubr.f32.gmra.mrb[0].mxu0 %v255
    %v358 = vpop.f32.mrb[0].mxu0
    %v359 = vadd.f32 0.0, %v358
    %v360 = vpop.f32.mrb[0].mxu0
    %361 = vdwg.mxu0
    %362 = vmatprep.subr.mxu0 %v226
    %363 = vmatpush1.xpose.msra.mxu0 %v225
    %364 = vmatprep.subr.mxu0 %v228
    %365 = vmatpush1.xpose.msra.mxu0 %v227
    %366 = vmatprep.subr.mxu0 %v230
    %367 = vmatpush1.xpose.msra.mxu0 %v229
    %368 = vmatprep.subr.mxu0 %v232
    %369 = vmatpush1.xpose.msra.mxu0 %v231
    %370 = vmatprep.subr.mxu0 %v234
    %371 = vmatpush1.xpose.msra.mxu0 %v233
    %372 = vmatprep.subr.mxu0 %v236
    %373 = vmatpush1.xpose.msra.mxu0 %v235
    %374 = vmatprep.subr.mxu0 %v238
    %375 = vmatpush1.xpose.msra.mxu0 %v237
    %376 = vmatprep.subr.mxu0 %v240
    %377 = vmatpush1.xpose.msra.mxu0 %v239
    %378 = vmatprep.subr.mxu0 0.0
    %379 = vmatpush1.xpose.msra.mxu0 0.0
    %380 = vmatprep.subr.mxu0 0.0
    %381 = vmatpush1.xpose.msra.mxu0 0.0
    %382 = vmatprep.subr.mxu0 0.0
    %383 = vmatpush1.xpose.msra.mxu0 0.0
    %384 = vmatprep.subr.mxu0 0.0
    %385 = vmatpush1.xpose.msra.mxu0 0.0
    %386 = vmatprep.subr.mxu0 0.0
    %387 = vmatpush1.xpose.msra.mxu0 0.0
    %388 = vmatprep.subr.mxu0 0.0
    %389 = vmatpush1.xpose.msra.mxu0 0.0
    %390 = vmatprep.subr.mxu0 0.0
    %391 = vmatpush1.xpose.msra.mxu0 0.0
    %392 = vmatprep.subr.mxu0 0.0
    %393 = vmatpush1.xpose.msra.mxu0 0.0
    %394 = vmatprep.subr.mxu0 0.0
    %395 = vmatpush1.xpose.msra.mxu0 0.0
    %396 = vmatprep.subr.mxu0 0.0
    %397 = vmatpush1.xpose.msra.mxu0 0.0
    %398 = vmatprep.subr.mxu0 0.0
    %399 = vmatpush1.xpose.msra.mxu0 0.0
    %400 = vmatprep.subr.mxu0 0.0
    %401 = vmatpush1.xpose.msra.mxu0 0.0
    %402 = vmatprep.subr.mxu0 0.0
    %403 = vmatpush1.xpose.msra.mxu0 0.0
    %404 = vmatprep.subr.mxu0 0.0
    %405 = vmatpush1.xpose.msra.mxu0 0.0
    %406 = vmatprep.subr.mxu0 0.0
    %407 = vmatpush1.xpose.msra.mxu0 0.0
    %408 = vmatprep.subr.mxu0 0.0
    %409 = vmatpush1.xpose.msra.mxu0 0.0
    %410 = vmatprep.subr.mxu0 0.0
    %411 = vmatpush1.xpose.msra.mxu0 0.0
    %412 = vmatprep.subr.mxu0 0.0
    %413 = vmatpush1.xpose.msra.mxu0 0.0
    %414 = vmatprep.subr.mxu0 0.0
    %415 = vmatpush1.xpose.msra.mxu0 0.0
    %416 = vmatprep.subr.mxu0 0.0
    %417 = vmatpush1.xpose.msra.mxu0 0.0
    %418 = vmatprep.subr.mxu0 0.0
    %419 = vmatpush1.xpose.msra.mxu0 0.0
    %420 = vmatprep.subr.mxu0 0.0
    %421 = vmatpush1.xpose.msra.mxu0 0.0
    %422 = vmatprep.subr.mxu0 0.0
    %423 = vmatpush1.xpose.msra.mxu0 0.0
    %424 = vmatprep.subr.mxu0 0.0
    %425 = vmatpush1.xpose.msra.mxu0 0.0
    %426 = vmatprep.mubr.f32.mxu0 %v226
    %427 = vmatmul.mubr.f32.gmra.mrb[0].mxu0 %v225
    %v428 = vpop.f32.mrb[0].mxu0
    %v429 = vadd.f32 %v324, %v428
    %v430 = vpop.f32.mrb[0].mxu0
    %431 = vmatprep.mubr.f32.mxu0 %v228
    %432 = vmatmul.mubr.f32.gmra.mrb[0].mxu0 %v227
    %v433 = vpop.f32.mrb[0].mxu0
    %v434 = vadd.f32 %v329, %v433
    %v435 = vpop.f32.mrb[0].mxu0
    %436 = vmatprep.mubr.f32.mxu0 %v230
    %437 = vmatmul.mubr.f32.gmra.mrb[0].mxu0 %v229
    %v438 = vpop.f32.mrb[0].mxu0
    %v439 = vadd.f32 %v334, %v438
    %v440 = vpop.f32.mrb[0].mxu0
    %441 = vmatprep.mubr.f32.mxu0 %v232
    %442 = vmatmul.mubr.f32.gmra.mrb[0].mxu0 %v231
    %v443 = vpop.f32.mrb[0].mxu0
    %v444 = vadd.f32 %v339, %v443
    %v445 = vpop.f32.mrb[0].mxu0
    %446 = vmatprep.mubr.f32.mxu0 %v234
    %447 = vmatmul.mubr.f32.gmra.mrb[0].mxu0 %v233
    %v448 = vpop.f32.mrb[0].mxu0
    %v449 = vadd.f32 %v344, %v448
    %v450 = vpop.f32.mrb[0].mxu0
    %451 = vmatprep.mubr.f32.mxu0 %v236
    %452 = vmatmul.mubr.f32.gmra.mrb[0].mxu0 %v235
    %v453 = vpop.f32.mrb[0].mxu0
    %v454 = vadd.f32 %v349, %v453
    %v455 = vpop.f32.mrb[0].mxu0
    %456 = vmatprep.mubr.f32.mxu0 %v238
    %457 = vmatmul.mubr.f32.gmra.mrb[0].mxu0 %v237
    %v458 = vpop.f32.mrb[0].mxu0
    %v459 = vadd.f32 %v354, %v458
    %v460 = vpop.f32.mrb[0].mxu0
    %461 = vmatprep.mubr.f32.mxu0 %v240
    %462 = vmatmul.mubr.f32.gmra.mrb[0].mxu0 %v239
    %v463 = vpop.f32.mrb[0].mxu0
    %v464 = vadd.f32 %v359, %v463
    %v465 = vpop.f32.mrb[0].mxu0
    %466 = vdwg.mxu0
    %v467 = vsub.f32 %v120, %v217
    %v468 = vsub.f32 %v121, %v217
    %v469 = vsub.f32 %v122, %v218
    %v470 = vsub.f32 %v123, %v218
    %v471 = vsub.f32 %v124, %v219
    %v472 = vsub.f32 %v125, %v219
    %v473 = vsub.f32 %v126, %v220
    %v474 = vsub.f32 %v127, %v220
    %v475 = vsub.f32 %v128, %v221
    %v476 = vsub.f32 %v129, %v221
    %v477 = vsub.f32 %v130, %v222
    %v478 = vsub.f32 %v131, %v222
    %v479 = vsub.f32 %v132, %v223
    %v480 = vsub.f32 %v133, %v223
    %v481 = vsub.f32 %v134, %v224
    %v482 = vsub.f32 %v135, %v224
    %483 = vmatprep.subr.mxu0 %v468
    %484 = vmatpush1.xpose.msra.mxu0 %v467
    %485 = vmatprep.subr.mxu0 %v470
    %486 = vmatpush1.xpose.msra.mxu0 %v469
    %487 = vmatprep.subr.mxu0 %v472
    %488 = vmatpush1.xpose.msra.mxu0 %v471
    %489 = vmatprep.subr.mxu0 %v474
    %490 = vmatpush1.xpose.msra.mxu0 %v473
    %491 = vmatprep.subr.mxu0 %v476
    %492 = vmatpush1.xpose.msra.mxu0 %v475
    %493 = vmatprep.subr.mxu0 %v478
    %494 = vmatpush1.xpose.msra.mxu0 %v477
    %495 = vmatprep.subr.mxu0 %v480
    %496 = vmatpush1.xpose.msra.mxu0 %v479
    %497 = vmatprep.subr.mxu0 %v482
    %498 = vmatpush1.xpose.msra.mxu0 %v481
    %499 = vmatprep.subr.mxu0 0.0
    %500 = vmatpush1.xpose.msra.mxu0 0.0
    %501 = vmatprep.subr.mxu0 0.0
    %502 = vmatpush1.xpose.msra.mxu0 0.0
    %503 = vmatprep.subr.mxu0 0.0
    %504 = vmatpush1.xpose.msra.mxu0 0.0
    %505 = vmatprep.subr.mxu0 0.0
    %506 = vmatpush1.xpose.msra.mxu0 0.0
    %507 = vmatprep.subr.mxu0 0.0
    %508 = vmatpush1.xpose.msra.mxu0 0.0
    %509 = vmatprep.subr.mxu0 0.0
    %510 = vmatpush1.xpose.msra.mxu0 0.0
    %511 = vmatprep.subr.mxu0 0.0
    %512 = vmatpush1.xpose.msra.mxu0 0.0
    %513 = vmatprep.subr.mxu0 0.0
    %514 = vmatpush1.xpose.msra.mxu0 0.0
    %515 = vmatprep.subr.mxu0 0.0
    %516 = vmatpush1.xpose.msra.mxu0 0.0
    %517 = vmatprep.subr.mxu0 0.0
    %518 = vmatpush1.xpose.msra.mxu0 0.0
    %519 = vmatprep.subr.mxu0 0.0
    %520 = vmatpush1.xpose.msra.mxu0 0.0
    %521 = vmatprep.subr.mxu0 0.0
    %522 = vmatpush1.xpose.msra.mxu0 0.0
    %523 = vmatprep.subr.mxu0 0.0
    %524 = vmatpush1.xpose.msra.mxu0 0.0
    %525 = vmatprep.subr.mxu0 0.0
    %526 = vmatpush1.xpose.msra.mxu0 0.0
    %527 = vmatprep.subr.mxu0 0.0
    %528 = vmatpush1.xpose.msra.mxu0 0.0
    %529 = vmatprep.subr.mxu0 0.0
    %530 = vmatpush1.xpose.msra.mxu0 0.0
    %531 = vmatprep.subr.mxu0 0.0
    %532 = vmatpush1.xpose.msra.mxu0 0.0
    %533 = vmatprep.subr.mxu0 0.0
    %534 = vmatpush1.xpose.msra.mxu0 0.0
    %535 = vmatprep.subr.mxu0 0.0
    %536 = vmatpush1.xpose.msra.mxu0 0.0
    %537 = vmatprep.subr.mxu0 0.0
    %538 = vmatpush1.xpose.msra.mxu0 0.0
    %539 = vmatprep.subr.mxu0 0.0
    %540 = vmatpush1.xpose.msra.mxu0 0.0
    %541 = vmatprep.subr.mxu0 0.0
    %542 = vmatpush1.xpose.msra.mxu0 0.0
    %543 = vmatprep.subr.mxu0 0.0
    %544 = vmatpush1.xpose.msra.mxu0 0.0
    %545 = vmatprep.subr.mxu0 0.0
    %546 = vmatpush1.xpose.msra.mxu0 0.0
    %547 = vmatprep.mubr.f32.mxu0 %v468
    %548 = vmatmul.mubr.f32.gmra.mrb[0].mxu0 %v467
    %v549 = vpop.f32.mrb[0].mxu0
    %v550 = vadd.f32 0.0, %v549
    %v551 = vpop.f32.mrb[0].mxu0
    %552 = vmatprep.mubr.f32.mxu0 %v470
    %553 = vmatmul.mubr.f32.gmra.mrb[0].mxu0 %v469
    %v554 = vpop.f32.mrb[0].mxu0
    %v555 = vadd.f32 0.0, %v554
    %v556 = vpop.f32.mrb[0].mxu0
    %557 = vmatprep.mubr.f32.mxu0 %v472
    %558 = vmatmul.mubr.f32.gmra.mrb[0].mxu0 %v471
    %v559 = vpop.f32.mrb[0].mxu0
    %v560 = vadd.f32 0.0, %v559
    %v561 = vpop.f32.mrb[0].mxu0
    %562 = vmatprep.mubr.f32.mxu0 %v474
    %563 = vmatmul.mubr.f32.gmra.mrb[0].mxu0 %v473
    %v564 = vpop.f32.mrb[0].mxu0
    %v565 = vadd.f32 0.0, %v564
    %v566 = vpop.f32.mrb[0].mxu0
    %567 = vmatprep.mubr.f32.mxu0 %v476
    %568 = vmatmul.mubr.f32.gmra.mrb[0].mxu0 %v475
    %v569 = vpop.f32.mrb[0].mxu0
    %v570 = vadd.f32 0.0, %v569
    %v571 = vpop.f32.mrb[0].mxu0
    %572 = vmatprep.mubr.f32.mxu0 %v478
    %573 = vmatmul.mubr.f32.gmra.mrb[0].mxu0 %v477
    %v574 = vpop.f32.mrb[0].mxu0
    %v575 = vadd.f32 0.0, %v574
    %v576 = vpop.f32.mrb[0].mxu0
    %577 = vmatprep.mubr.f32.mxu0 %v480
    %578 = vmatmul.mubr.f32.gmra.mrb[0].mxu0 %v479
    %v579 = vpop.f32.mrb[0].mxu0
    %v580 = vadd.f32 0.0, %v579
    %v581 = vpop.f32.mrb[0].mxu0
    %582 = vmatprep.mubr.f32.mxu0 %v482
    %583 = vmatmul.mubr.f32.gmra.mrb[0].mxu0 %v481
    %v584 = vpop.f32.mrb[0].mxu0
    %v585 = vadd.f32 0.0, %v584
    %v586 = vpop.f32.mrb[0].mxu0
    %587 = vdwg.mxu0
    %v588 = vadd.f32 %v429, %v550
    %v589 = vadd.f32 %v434, %v555
    %v590 = vadd.f32 %v439, %v560
    %v591 = vadd.f32 %v444, %v565
    %v592 = vadd.f32 %v449, %v570
    %v593 = vadd.f32 %v454, %v575
    %v594 = vadd.f32 %v459, %v580
    %v595 = vadd.f32 %v464, %v585
    %v596 = vsub.f32 %v169, %v217
    %v597 = vsub.f32 %v170, %v217
    %v598 = vsub.f32 %v171, %v218
    %v599 = vsub.f32 %v172, %v218
    %v600 = vsub.f32 %v173, %v219
    %v601 = vsub.f32 %v174, %v219
    %v602 = vsub.f32 %v175, %v220
    %v603 = vsub.f32 %v176, %v220
    %v604 = vsub.f32 %v177, %v221
    %v605 = vsub.f32 %v178, %v221
    %v606 = vsub.f32 %v179, %v222
    %v607 = vsub.f32 %v180, %v222
    %v608 = vsub.f32 %v181, %v223
    %v609 = vsub.f32 %v182, %v223
    %v610 = vsub.f32 %v183, %v224
    %v611 = vsub.f32 %v184, %v224
    %612 = vmatprep.subr.mxu0 %v597
    %613 = vmatpush1.xpose.msra.mxu0 %v596
    %614 = vmatprep.subr.mxu0 %v599
    %615 = vmatpush1.xpose.msra.mxu0 %v598
    %616 = vmatprep.subr.mxu0 %v601
    %617 = vmatpush1.xpose.msra.mxu0 %v600
    %618 = vmatprep.subr.mxu0 %v603
    %619 = vmatpush1.xpose.msra.mxu0 %v602
    %620 = vmatprep.subr.mxu0 %v605
    %621 = vmatpush1.xpose.msra.mxu0 %v604
    %622 = vmatprep.subr.mxu0 %v607
    %623 = vmatpush1.xpose.msra.mxu0 %v606
    %624 = vmatprep.subr.mxu0 %v609
    %625 = vmatpush1.xpose.msra.mxu0 %v608
    %626 = vmatprep.subr.mxu0 %v611
    %627 = vmatpush1.xpose.msra.mxu0 %v610
    %628 = vmatprep.subr.mxu0 0.0
    %629 = vmatpush1.xpose.msra.mxu0 0.0
    %630 = vmatprep.subr.mxu0 0.0
    %631 = vmatpush1.xpose.msra.mxu0 0.0
    %632 = vmatprep.subr.mxu0 0.0
    %633 = vmatpush1.xpose.msra.mxu0 0.0
    %634 = vmatprep.subr.mxu0 0.0
    %635 = vmatpush1.xpose.msra.mxu0 0.0
    %636 = vmatprep.subr.mxu0 0.0
    %637 = vmatpush1.xpose.msra.mxu0 0.0
    %638 = vmatprep.subr.mxu0 0.0
    %639 = vmatpush1.xpose.msra.mxu0 0.0
    %640 = vmatprep.subr.mxu0 0.0
    %641 = vmatpush1.xpose.msra.mxu0 0.0
    %642 = vmatprep.subr.mxu0 0.0
    %643 = vmatpush1.xpose.msra.mxu0 0.0
    %644 = vmatprep.subr.mxu0 0.0
    %645 = vmatpush1.xpose.msra.mxu0 0.0
    %646 = vmatprep.subr.mxu0 0.0
    %647 = vmatpush1.xpose.msra.mxu0 0.0
    %648 = vmatprep.subr.mxu0 0.0
    %649 = vmatpush1.xpose.msra.mxu0 0.0
    %650 = vmatprep.subr.mxu0 0.0
    %651 = vmatpush1.xpose.msra.mxu0 0.0
    %652 = vmatprep.subr.mxu0 0.0
    %653 = vmatpush1.xpose.msra.mxu0 0.0
    %654 = vmatprep.subr.mxu0 0.0
    %655 = vmatpush1.xpose.msra.mxu0 0.0
    %656 = vmatprep.subr.mxu0 0.0
    %657 = vmatpush1.xpose.msra.mxu0 0.0
    %658 = vmatprep.subr.mxu0 0.0
    %659 = vmatpush1.xpose.msra.mxu0 0.0
    %660 = vmatprep.subr.mxu0 0.0
    %661 = vmatpush1.xpose.msra.mxu0 0.0
    %662 = vmatprep.subr.mxu0 0.0
    %663 = vmatpush1.xpose.msra.mxu0 0.0
    %664 = vmatprep.subr.mxu0 0.0
    %665 = vmatpush1.xpose.msra.mxu0 0.0
    %666 = vmatprep.subr.mxu0 0.0
    %667 = vmatpush1.xpose.msra.mxu0 0.0
    %668 = vmatprep.subr.mxu0 0.0
    %669 = vmatpush1.xpose.msra.mxu0 0.0
    %670 = vmatprep.subr.mxu0 0.0
    %671 = vmatpush1.xpose.msra.mxu0 0.0
    %672 = vmatprep.subr.mxu0 0.0
    %673 = vmatpush1.xpose.msra.mxu0 0.0
    %674 = vmatprep.subr.mxu0 0.0
    %675 = vmatpush1.xpose.msra.mxu0 0.0
    %676 = vmatprep.mubr.f32.mxu0 %v597
    %677 = vmatmul.mubr.f32.gmra.mrb[0].mxu0 %v596
    %v678 = vpop.f32.mrb[0].mxu0
    %v679 = vadd.f32 0.0, %v678
    %v680 = vpop.f32.mrb[0].mxu0
    %681 = vmatprep.mubr.f32.mxu0 %v599
    %682 = vmatmul.mubr.f32.gmra.mrb[0].mxu0 %v598
    %v683 = vpop.f32.mrb[0].mxu0
    %v684 = vadd.f32 0.0, %v683
    %v685 = vpop.f32.mrb[0].mxu0
    %686 = vmatprep.mubr.f32.mxu0 %v601
    %687 = vmatmul.mubr.f32.gmra.mrb[0].mxu0 %v600
    %v688 = vpop.f32.mrb[0].mxu0
    %v689 = vadd.f32 0.0, %v688
    %v690 = vpop.f32.mrb[0].mxu0
    %691 = vmatprep.mubr.f32.mxu0 %v603
    %692 = vmatmul.mubr.f32.gmra.mrb[0].mxu0 %v602
    %v693 = vpop.f32.mrb[0].mxu0
    %v694 = vadd.f32 0.0, %v693
    %v695 = vpop.f32.mrb[0].mxu0
    %696 = vmatprep.mubr.f32.mxu0 %v605
    %697 = vmatmul.mubr.f32.gmra.mrb[0].mxu0 %v604
    %v698 = vpop.f32.mrb[0].mxu0
    %v699 = vadd.f32 0.0, %v698
    %v700 = vpop.f32.mrb[0].mxu0
    %701 = vmatprep.mubr.f32.mxu0 %v607
    %702 = vmatmul.mubr.f32.gmra.mrb[0].mxu0 %v606
    %v703 = vpop.f32.mrb[0].mxu0
    %v704 = vadd.f32 0.0, %v703
    %v705 = vpop.f32.mrb[0].mxu0
    %706 = vmatprep.mubr.f32.mxu0 %v609
    %707 = vmatmul.mubr.f32.gmra.mrb[0].mxu0 %v608
    %v708 = vpop.f32.mrb[0].mxu0
    %v709 = vadd.f32 0.0, %v708
    %v710 = vpop.f32.mrb[0].mxu0
    %711 = vmatprep.mubr.f32.mxu0 %v611
    %712 = vmatmul.mubr.f32.gmra.mrb[0].mxu0 %v610
    %v713 = vpop.f32.mrb[0].mxu0
    %v714 = vadd.f32 0.0, %v713
    %v715 = vpop.f32.mrb[0].mxu0
    %716 = vdwg.mxu0
    %v717 = vadd.f32 %v588, %v679
    %v718 = vadd.f32 %v589, %v684
    %v719 = vadd.f32 %v590, %v689
    %v720 = vadd.f32 %v591, %v694
    %v721 = vadd.f32 %v592, %v699
    %v722 = vadd.f32 %v593, %v704
    %v723 = vadd.f32 %v594, %v709
    %v724 = vadd.f32 %v595, %v714
    %v725 = vmul.f32 %v717, 0.0009775171
    %v726 = vmul.f32 %v718, 0.0009775171
    %v727 = vmul.f32 %v719, 0.0009775171
    %v728 = vmul.f32 %v720, 0.0009775171
    %v729 = vmul.f32 %v721, 0.0009775171
    %v730 = vmul.f32 %v722, 0.0009775171
    %v731 = vmul.f32 %v723, 0.0009775171
    %v732 = vmul.f32 %v724, 0.0009775171
    %vm733 = vcmask 523264
    %734 = vst.msk [vmem:[%s1] sm:$0xff] %vm733, %v725
    %735 = vst.msk [vmem:[%s1 + $0x8] sm:$0xff] %vm733, %v726
    %736 = vst.msk [vmem:[%s1 + $0x10] sm:$0xff] %vm733, %v727
    %737 = vst.msk [vmem:[%s1 + $0x18] sm:$0xff] %vm733, %v728
    %738 = vst.msk [vmem:[%s1 + $0x20] sm:$0xff] %vm733, %v729
    %739 = vst.msk [vmem:[%s1 + $0x28] sm:$0xff] %vm733, %v730
    %740 = vst.msk [vmem:[%s1 + $0x30] sm:$0xff] %vm733, %v731
    %741 = vst.msk [vmem:[%s1 + $0x38] sm:$0xff] %vm733, %v732
    %s742 = scalar_lea.vmem [#allocation2], 512
    %v743 = vld [vmem:[%s742] sm:$0xff]
    %v744 = vld [vmem:[%s742 + $0x8] sm:$0xff]
    %v745 = vld [vmem:[%s742 + $0x10] sm:$0xff]
    %v746 = vld [vmem:[%s742 + $0x18] sm:$0xff]
    %v747 = vld [vmem:[%s742 + $0x20] sm:$0xff]
    %v748 = vld [vmem:[%s742 + $0x28] sm:$0xff]
    %v749 = vld [vmem:[%s742 + $0x30] sm:$0xff]
    %v750 = vld [vmem:[%s742 + $0x38] sm:$0xff]
    %v751 = vld [vmem:[%s742 + $0x40] sm:$0xff]
    %v752 = vld [vmem:[%s742 + $0x48] sm:$0xff]
    %v753 = vld [vmem:[%s742 + $0x50] sm:$0xff]
    %v754 = vld [vmem:[%s742 + $0x58] sm:$0xff]
    %v755 = vld [vmem:[%s742 + $0x60] sm:$0xff]
    %v756 = vld [vmem:[%s742 + $0x68] sm:$0xff]
    %v757 = vld [vmem:[%s742 + $0x70] sm:$0xff]
    %v758 = vld [vmem:[%s742 + $0x78] sm:$0xff]
    %v759 = vadd.f32 %v743, %v744
    %760 = vadd.xlane.f32.xlu0 %v759
    %v761 = vpop.xlane.xlu0 %760
    %v762 = vadd.f32 %v745, %v746
    %763 = vadd.xlane.f32.xlu0 %v762
    %v764 = vpop.xlane.xlu0 %763
    %v765 = vadd.f32 %v747, %v748
    %766 = vadd.xlane.f32.xlu0 %v765
    %v767 = vpop.xlane.xlu0 %766
    %v768 = vadd.f32 %v749, %v750
    %769 = vadd.xlane.f32.xlu0 %v768
    %v770 = vpop.xlane.xlu0 %769
    %v771 = vadd.f32 %v751, %v752
    %772 = vadd.xlane.f32.xlu0 %v771
    %v773 = vpop.xlane.xlu0 %772
    %v774 = vadd.f32 %v753, %v754
    %775 = vadd.xlane.f32.xlu0 %v774
    %v776 = vpop.xlane.xlu0 %775
    %v777 = vadd.f32 %v755, %v756
    %778 = vadd.xlane.f32.xlu0 %v777
    %v779 = vpop.xlane.xlu0 %778
    %v780 = vadd.f32 %v757, %v758
    %781 = vadd.xlane.f32.xlu0 %v780
    %v782 = vpop.xlane.xlu0 %781
    %v783 = vadd.f32 %v761, 0.0
    %v784 = vadd.f32 %v764, 0.0
    %v785 = vadd.f32 %v767, 0.0
    %v786 = vadd.f32 %v770, 0.0
    %v787 = vadd.f32 %v773, 0.0
    %v788 = vadd.f32 %v776, 0.0
    %v789 = vadd.f32 %v779, 0.0
    %v790 = vadd.f32 %v782, 0.0
    %s791 = scalar_lea.vmem [#allocation2], 640
    %v792 = vld [vmem:[%s791] sm:$0xff]
    %v793 = vld [vmem:[%s791 + $0x8] sm:$0xff]
    %v794 = vld [vmem:[%s791 + $0x10] sm:$0xff]
    %v795 = vld [vmem:[%s791 + $0x18] sm:$0xff]
    %v796 = vld [vmem:[%s791 + $0x20] sm:$0xff]
    %v797 = vld [vmem:[%s791 + $0x28] sm:$0xff]
    %v798 = vld [vmem:[%s791 + $0x30] sm:$0xff]
    %v799 = vld [vmem:[%s791 + $0x38] sm:$0xff]
    %v800 = vld [vmem:[%s791 + $0x40] sm:$0xff]
    %v801 = vld [vmem:[%s791 + $0x48] sm:$0xff]
    %v802 = vld [vmem:[%s791 + $0x50] sm:$0xff]
    %v803 = vld [vmem:[%s791 + $0x58] sm:$0xff]
    %v804 = vld [vmem:[%s791 + $0x60] sm:$0xff]
    %v805 = vld [vmem:[%s791 + $0x68] sm:$0xff]
    %v806 = vld [vmem:[%s791 + $0x70] sm:$0xff]
    %v807 = vld [vmem:[%s791 + $0x78] sm:$0xff]
    %v808 = vadd.f32 %v792, %v793
    %809 = vadd.xlane.f32.xlu0 %v808
    %v810 = vpop.xlane.xlu0 %809
    %v811 = vadd.f32 %v794, %v795
    %812 = vadd.xlane.f32.xlu0 %v811
    %v813 = vpop.xlane.xlu0 %812
    %v814 = vadd.f32 %v796, %v797
    %815 = vadd.xlane.f32.xlu0 %v814
    %v816 = vpop.xlane.xlu0 %815
    %v817 = vadd.f32 %v798, %v799
    %818 = vadd.xlane.f32.xlu0 %v817
    %v819 = vpop.xlane.xlu0 %818
    %v820 = vadd.f32 %v800, %v801
    %821 = vadd.xlane.f32.xlu0 %v820
    %v822 = vpop.xlane.xlu0 %821
    %v823 = vadd.f32 %v802, %v803
    %824 = vadd.xlane.f32.xlu0 %v823
    %v825 = vpop.xlane.xlu0 %824
    %v826 = vadd.f32 %v804, %v805
    %827 = vadd.xlane.f32.xlu0 %v826
    %v828 = vpop.xlane.xlu0 %827
    %v829 = vadd.f32 %v806, %v807
    %830 = vadd.xlane.f32.xlu0 %v829
    %v831 = vpop.xlane.xlu0 %830
    %v832 = vadd.f32 %v783, %v810
    %v833 = vadd.f32 %v784, %v813
    %v834 = vadd.f32 %v785, %v816
    %v835 = vadd.f32 %v786, %v819
    %v836 = vadd.f32 %v787, %v822
    %v837 = vadd.f32 %v788, %v825
    %v838 = vadd.f32 %v789, %v828
    %v839 = vadd.f32 %v790, %v831
    %s840 = scalar_lea.vmem [#allocation2], 768
    %v841 = vld [vmem:[%s840] sm:$0xff]
    %v842 = vld [vmem:[%s840 + $0x8] sm:$0xff]
    %v843 = vld [vmem:[%s840 + $0x10] sm:$0xff]
    %v844 = vld [vmem:[%s840 + $0x18] sm:$0xff]
    %v845 = vld [vmem:[%s840 + $0x20] sm:$0xff]
    %v846 = vld [vmem:[%s840 + $0x28] sm:$0xff]
    %v847 = vld [vmem:[%s840 + $0x30] sm:$0xff]
    %v848 = vld [vmem:[%s840 + $0x38] sm:$0xff]
    %v849 = vld [vmem:[%s840 + $0x40] sm:$0xff]
    %v850 = vld [vmem:[%s840 + $0x48] sm:$0xff]
    %v851 = vld [vmem:[%s840 + $0x50] sm:$0xff]
    %v852 = vld [vmem:[%s840 + $0x58] sm:$0xff]
    %v853 = vld [vmem:[%s840 + $0x60] sm:$0xff]
    %v854 = vld [vmem:[%s840 + $0x68] sm:$0xff]
    %v855 = vld [vmem:[%s840 + $0x70] sm:$0xff]
    %v856 = vld [vmem:[%s840 + $0x78] sm:$0xff]
    %v857 = vadd.f32 %v841, %v842
    %858 = vadd.xlane.f32.xlu0 %v857
    %v859 = vpop.xlane.xlu0 %858
    %v860 = vadd.f32 %v843, %v844
    %861 = vadd.xlane.f32.xlu0 %v860
    %v862 = vpop.xlane.xlu0 %861
    %v863 = vadd.f32 %v845, %v846
    %864 = vadd.xlane.f32.xlu0 %v863
    %v865 = vpop.xlane.xlu0 %864
    %v866 = vadd.f32 %v847, %v848
    %867 = vadd.xlane.f32.xlu0 %v866
    %v868 = vpop.xlane.xlu0 %867
    %v869 = vadd.f32 %v849, %v850
    %870 = vadd.xlane.f32.xlu0 %v869
    %v871 = vpop.xlane.xlu0 %870
    %v872 = vadd.f32 %v851, %v852
    %873 = vadd.xlane.f32.xlu0 %v872
    %v874 = vpop.xlane.xlu0 %873
    %v875 = vadd.f32 %v853, %v854
    %876 = vadd.xlane.f32.xlu0 %v875
    %v877 = vpop.xlane.xlu0 %876
    %v878 = vadd.f32 %v855, %v856
    %879 = vadd.xlane.f32.xlu0 %v878
    %v880 = vpop.xlane.xlu0 %879
    %v881 = vadd.f32 %v832, %v859
    %v882 = vadd.f32 %v833, %v862
    %v883 = vadd.f32 %v834, %v865
    %v884 = vadd.f32 %v835, %v868
    %v885 = vadd.f32 %v836, %v871
    %v886 = vadd.f32 %v837, %v874
    %v887 = vadd.f32 %v838, %v877
    %v888 = vadd.f32 %v839, %v880
    %s889 = scalar_lea.vmem [#allocation2], 896
    %v890 = vld [vmem:[%s889] sm:$0xff]
    %v891 = vld [vmem:[%s889 + $0x8] sm:$0xff]
    %v892 = vld [vmem:[%s889 + $0x10] sm:$0xff]
    %v893 = vld [vmem:[%s889 + $0x18] sm:$0xff]
    %v894 = vld [vmem:[%s889 + $0x20] sm:$0xff]
    %v895 = vld [vmem:[%s889 + $0x28] sm:$0xff]
    %v896 = vld [vmem:[%s889 + $0x30] sm:$0xff]
    %v897 = vld [vmem:[%s889 + $0x38] sm:$0xff]
    %v898 = vld [vmem:[%s889 + $0x40] sm:$0xff]
    %v899 = vld [vmem:[%s889 + $0x48] sm:$0xff]
    %v900 = vld [vmem:[%s889 + $0x50] sm:$0xff]
    %v901 = vld [vmem:[%s889 + $0x58] sm:$0xff]
    %v902 = vld [vmem:[%s889 + $0x60] sm:$0xff]
    %v903 = vld [vmem:[%s889 + $0x68] sm:$0xff]
    %v904 = vld [vmem:[%s889 + $0x70] sm:$0xff]
    %v905 = vld [vmem:[%s889 + $0x78] sm:$0xff]
    %v906 = vadd.f32 %v890, %v891
    %907 = vadd.xlane.f32.xlu0 %v906
    %v908 = vpop.xlane.xlu0 %907
    %v909 = vadd.f32 %v892, %v893
    %910 = vadd.xlane.f32.xlu0 %v909
    %v911 = vpop.xlane.xlu0 %910
    %v912 = vadd.f32 %v894, %v895
    %913 = vadd.xlane.f32.xlu0 %v912
    %v914 = vpop.xlane.xlu0 %913
    %v915 = vadd.f32 %v896, %v897
    %916 = vadd.xlane.f32.xlu0 %v915
    %v917 = vpop.xlane.xlu0 %916
    %v918 = vadd.f32 %v898, %v899
    %919 = vadd.xlane.f32.xlu0 %v918
    %v920 = vpop.xlane.xlu0 %919
    %v921 = vadd.f32 %v900, %v901
    %922 = vadd.xlane.f32.xlu0 %v921
    %v923 = vpop.xlane.xlu0 %922
    %v924 = vadd.f32 %v902, %v903
    %925 = vadd.xlane.f32.xlu0 %v924
    %v926 = vpop.xlane.xlu0 %925
    %v927 = vadd.f32 %v904, %v905
    %928 = vadd.xlane.f32.xlu0 %v927
    %v929 = vpop.xlane.xlu0 %928
    %v930 = vadd.f32 %v881, %v908
    %v931 = vadd.f32 %v882, %v911
    %v932 = vadd.f32 %v883, %v914
    %v933 = vadd.f32 %v884, %v917
    %v934 = vadd.f32 %v885, %v920
    %v935 = vadd.f32 %v886, %v923
    %v936 = vadd.f32 %v887, %v926
    %v937 = vadd.f32 %v888, %v929
    %v938 = vmul.f32 %v930, 0.0009765625
    %v939 = vmul.f32 %v931, 0.0009765625
    %v940 = vmul.f32 %v932, 0.0009765625
    %v941 = vmul.f32 %v933, 0.0009765625
    %v942 = vmul.f32 %v934, 0.0009765625
    %v943 = vmul.f32 %v935, 0.0009765625
    %v944 = vmul.f32 %v936, 0.0009765625
    %v945 = vmul.f32 %v937, 0.0009765625
    %v946 = vsub.f32 %v743, %v938
    %v947 = vsub.f32 %v744, %v938
    %v948 = vsub.f32 %v745, %v939
    %v949 = vsub.f32 %v746, %v939
    %v950 = vsub.f32 %v747, %v940
    %v951 = vsub.f32 %v748, %v940
    %v952 = vsub.f32 %v749, %v941
    %v953 = vsub.f32 %v750, %v941
    %v954 = vsub.f32 %v751, %v942
    %v955 = vsub.f32 %v752, %v942
    %v956 = vsub.f32 %v753, %v943
    %v957 = vsub.f32 %v754, %v943
    %v958 = vsub.f32 %v755, %v944
    %v959 = vsub.f32 %v756, %v944
    %v960 = vsub.f32 %v757, %v945
    %v961 = vsub.f32 %v758, %v945
    %v962 = vsub.f32 %v792, %v938
    %v963 = vsub.f32 %v793, %v938
    %v964 = vsub.f32 %v794, %v939
    %v965 = vsub.f32 %v795, %v939
    %v966 = vsub.f32 %v796, %v940
    %v967 = vsub.f32 %v797, %v940
    %v968 = vsub.f32 %v798, %v941
    %v969 = vsub.f32 %v799, %v941
    %v970 = vsub.f32 %v800, %v942
    %v971 = vsub.f32 %v801, %v942
    %v972 = vsub.f32 %v802, %v943
    %v973 = vsub.f32 %v803, %v943
    %v974 = vsub.f32 %v804, %v944
    %v975 = vsub.f32 %v805, %v944
    %v976 = vsub.f32 %v806, %v945
    %v977 = vsub.f32 %v807, %v945
    %978 = vmatprep.subr.mxu0 %v963
    %979 = vmatpush1.xpose.msra.mxu0 %v962
    %980 = vmatprep.subr.mxu0 %v965
    %981 = vmatpush1.xpose.msra.mxu0 %v964
    %982 = vmatprep.subr.mxu0 %v967
    %983 = vmatpush1.xpose.msra.mxu0 %v966
    %984 = vmatprep.subr.mxu0 %v969
    %985 = vmatpush1.xpose.msra.mxu0 %v968
    %986 = vmatprep.subr.mxu0 %v971
    %987 = vmatpush1.xpose.msra.mxu0 %v970
    %988 = vmatprep.subr.mxu0 %v973
    %989 = vmatpush1.xpose.msra.mxu0 %v972
    %990 = vmatprep.subr.mxu0 %v975
    %991 = vmatpush1.xpose.msra.mxu0 %v974
    %992 = vmatprep.subr.mxu0 %v977
    %993 = vmatpush1.xpose.msra.mxu0 %v976
    %994 = vmatprep.subr.mxu0 0.0
    %995 = vmatpush1.xpose.msra.mxu0 0.0
    %996 = vmatprep.subr.mxu0 0.0
    %997 = vmatpush1.xpose.msra.mxu0 0.0
    %998 = vmatprep.subr.mxu0 0.0
    %999 = vmatpush1.xpose.msra.mxu0 0.0
    %1000 = vmatprep.subr.mxu0 0.0
    %1001 = vmatpush1.xpose.msra.mxu0 0.0
    %1002 = vmatprep.subr.mxu0 0.0
    %1003 = vmatpush1.xpose.msra.mxu0 0.0
    %1004 = vmatprep.subr.mxu0 0.0
    %1005 = vmatpush1.xpose.msra.mxu0 0.0
    %1006 = vmatprep.subr.mxu0 0.0
    %1007 = vmatpush1.xpose.msra.mxu0 0.0
    %1008 = vmatprep.subr.mxu0 0.0
    %1009 = vmatpush1.xpose.msra.mxu0 0.0
    %1010 = vmatprep.subr.mxu0 0.0
    %1011 = vmatpush1.xpose.msra.mxu0 0.0
    %1012 = vmatprep.subr.mxu0 0.0
    %1013 = vmatpush1.xpose.msra.mxu0 0.0
    %1014 = vmatprep.subr.mxu0 0.0
    %1015 = vmatpush1.xpose.msra.mxu0 0.0
    %1016 = vmatprep.subr.mxu0 0.0
    %1017 = vmatpush1.xpose.msra.mxu0 0.0
    %1018 = vmatprep.subr.mxu0 0.0
    %1019 = vmatpush1.xpose.msra.mxu0 0.0
    %1020 = vmatprep.subr.mxu0 0.0
    %1021 = vmatpush1.xpose.msra.mxu0 0.0
    %1022 = vmatprep.subr.mxu0 0.0
    %1023 = vmatpush1.xpose.msra.mxu0 0.0
    %1024 = vmatprep.subr.mxu0 0.0
    %1025 = vmatpush1.xpose.msra.mxu0 0.0
    %1026 = vmatprep.subr.mxu0 0.0
    %1027 = vmatpush1.xpose.msra.mxu0 0.0
    %1028 = vmatprep.subr.mxu0 0.0
    %1029 = vmatpush1.xpose.msra.mxu0 0.0
    %1030 = vmatprep.subr.mxu0 0.0
    %1031 = vmatpush1.xpose.msra.mxu0 0.0
    %1032 = vmatprep.subr.mxu0 0.0
    %1033 = vmatpush1.xpose.msra.mxu0 0.0
    %1034 = vmatprep.subr.mxu0 0.0
    %1035 = vmatpush1.xpose.msra.mxu0 0.0
    %1036 = vmatprep.subr.mxu0 0.0
    %1037 = vmatpush1.xpose.msra.mxu0 0.0
    %1038 = vmatprep.subr.mxu0 0.0
    %1039 = vmatpush1.xpose.msra.mxu0 0.0
    %1040 = vmatprep.subr.mxu0 0.0
    %1041 = vmatpush1.xpose.msra.mxu0 0.0
    %1042 = vmatprep.mubr.f32.mxu0 %v963
    %1043 = vmatmul.mubr.f32.gmra.mrb[0].mxu0 %v962
    %v1044 = vpop.f32.mrb[0].mxu0
    %v1045 = vadd.f32 0.0, %v1044
    %v1046 = vpop.f32.mrb[0].mxu0
    %1047 = vmatprep.mubr.f32.mxu0 %v965
    %1048 = vmatmul.mubr.f32.gmra.mrb[0].mxu0 %v964
    %v1049 = vpop.f32.mrb[0].mxu0
    %v1050 = vadd.f32 0.0, %v1049
    %v1051 = vpop.f32.mrb[0].mxu0
    %1052 = vmatprep.mubr.f32.mxu0 %v967
    %1053 = vmatmul.mubr.f32.gmra.mrb[0].mxu0 %v966
    %v1054 = vpop.f32.mrb[0].mxu0
    %v1055 = vadd.f32 0.0, %v1054
    %v1056 = vpop.f32.mrb[0].mxu0
    %1057 = vmatprep.mubr.f32.mxu0 %v969
    %1058 = vmatmul.mubr.f32.gmra.mrb[0].mxu0 %v968
    %v1059 = vpop.f32.mrb[0].mxu0
    %v1060 = vadd.f32 0.0, %v1059
    %v1061 = vpop.f32.mrb[0].mxu0
    %1062 = vmatprep.mubr.f32.mxu0 %v971
    %1063 = vmatmul.mubr.f32.gmra.mrb[0].mxu0 %v970
    %v1064 = vpop.f32.mrb[0].mxu0
    %v1065 = vadd.f32 0.0, %v1064
    %v1066 = vpop.f32.mrb[0].mxu0
    %1067 = vmatprep.mubr.f32.mxu0 %v973
    %1068 = vmatmul.mubr.f32.gmra.mrb[0].mxu0 %v972
    %v1069 = vpop.f32.mrb[0].mxu0
    %v1070 = vadd.f32 0.0, %v1069
    %v1071 = vpop.f32.mrb[0].mxu0
    %1072 = vmatprep.mubr.f32.mxu0 %v975
    %1073 = vmatmul.mubr.f32.gmra.mrb[0].mxu0 %v974
    %v1074 = vpop.f32.mrb[0].mxu0
    %v1075 = vadd.f32 0.0, %v1074
    %v1076 = vpop.f32.mrb[0].mxu0
    %1077 = vmatprep.mubr.f32.mxu0 %v977
    %1078 = vmatmul.mubr.f32.gmra.mrb[0].mxu0 %v976
    %v1079 = vpop.f32.mrb[0].mxu0
    %v1080 = vadd.f32 0.0, %v1079
    %v1081 = vpop.f32.mrb[0].mxu0
    %1082 = vdwg.mxu0
    %1083 = vmatprep.subr.mxu0 %v947
    %1084 = vmatpush1.xpose.msra.mxu0 %v946
    %1085 = vmatprep.subr.mxu0 %v949
    %1086 = vmatpush1.xpose.msra.mxu0 %v948
    %1087 = vmatprep.subr.mxu0 %v951
    %1088 = vmatpush1.xpose.msra.mxu0 %v950
    %1089 = vmatprep.subr.mxu0 %v953
    %1090 = vmatpush1.xpose.msra.mxu0 %v952
    %1091 = vmatprep.subr.mxu0 %v955
    %1092 = vmatpush1.xpose.msra.mxu0 %v954
    %1093 = vmatprep.subr.mxu0 %v957
    %1094 = vmatpush1.xpose.msra.mxu0 %v956
    %1095 = vmatprep.subr.mxu0 %v959
    %1096 = vmatpush1.xpose.msra.mxu0 %v958
    %1097 = vmatprep.subr.mxu0 %v961
    %1098 = vmatpush1.xpose.msra.mxu0 %v960
    %1099 = vmatprep.subr.mxu0 0.0
    %1100 = vmatpush1.xpose.msra.mxu0 0.0
    %1101 = vmatprep.subr.mxu0 0.0
    %1102 = vmatpush1.xpose.msra.mxu0 0.0
    %1103 = vmatprep.subr.mxu0 0.0
    %1104 = vmatpush1.xpose.msra.mxu0 0.0
    %1105 = vmatprep.subr.mxu0 0.0
    %1106 = vmatpush1.xpose.msra.mxu0 0.0
    %1107 = vmatprep.subr.mxu0 0.0
    %1108 = vmatpush1.xpose.msra.mxu0 0.0
    %1109 = vmatprep.subr.mxu0 0.0
    %1110 = vmatpush1.xpose.msra.mxu0 0.0
    %1111 = vmatprep.subr.mxu0 0.0
    %1112 = vmatpush1.xpose.msra.mxu0 0.0
    %1113 = vmatprep.subr.mxu0 0.0
    %1114 = vmatpush1.xpose.msra.mxu0 0.0
    %1115 = vmatprep.subr.mxu0 0.0
    %1116 = vmatpush1.xpose.msra.mxu0 0.0
    %1117 = vmatprep.subr.mxu0 0.0
    %1118 = vmatpush1.xpose.msra.mxu0 0.0
    %1119 = vmatprep.subr.mxu0 0.0
    %1120 = vmatpush1.xpose.msra.mxu0 0.0
    %1121 = vmatprep.subr.mxu0 0.0
    %1122 = vmatpush1.xpose.msra.mxu0 0.0
    %1123 = vmatprep.subr.mxu0 0.0
    %1124 = vmatpush1.xpose.msra.mxu0 0.0
    %1125 = vmatprep.subr.mxu0 0.0
    %1126 = vmatpush1.xpose.msra.mxu0 0.0
    %1127 = vmatprep.subr.mxu0 0.0
    %1128 = vmatpush1.xpose.msra.mxu0 0.0
    %1129 = vmatprep.subr.mxu0 0.0
    %1130 = vmatpush1.xpose.msra.mxu0 0.0
    %1131 = vmatprep.subr.mxu0 0.0
    %1132 = vmatpush1.xpose.msra.mxu0 0.0
    %1133 = vmatprep.subr.mxu0 0.0
    %1134 = vmatpush1.xpose.msra.mxu0 0.0
    %1135 = vmatprep.subr.mxu0 0.0
    %1136 = vmatpush1.xpose.msra.mxu0 0.0
    %1137 = vmatprep.subr.mxu0 0.0
    %1138 = vmatpush1.xpose.msra.mxu0 0.0
    %1139 = vmatprep.subr.mxu0 0.0
    %1140 = vmatpush1.xpose.msra.mxu0 0.0
    %1141 = vmatprep.subr.mxu0 0.0
    %1142 = vmatpush1.xpose.msra.mxu0 0.0
    %1143 = vmatprep.subr.mxu0 0.0
    %1144 = vmatpush1.xpose.msra.mxu0 0.0
    %1145 = vmatprep.subr.mxu0 0.0
    %1146 = vmatpush1.xpose.msra.mxu0 0.0
    %1147 = vmatprep.mubr.f32.mxu0 %v947
    %1148 = vmatmul.mubr.f32.gmra.mrb[0].mxu0 %v946
    %v1149 = vpop.f32.mrb[0].mxu0
    %v1150 = vadd.f32 %v1045, %v1149
    %v1151 = vpop.f32.mrb[0].mxu0
    %1152 = vmatprep.mubr.f32.mxu0 %v949
    %1153 = vmatmul.mubr.f32.gmra.mrb[0].mxu0 %v948
    %v1154 = vpop.f32.mrb[0].mxu0
    %v1155 = vadd.f32 %v1050, %v1154
    %v1156 = vpop.f32.mrb[0].mxu0
    %1157 = vmatprep.mubr.f32.mxu0 %v951
    %1158 = vmatmul.mubr.f32.gmra.mrb[0].mxu0 %v950
    %v1159 = vpop.f32.mrb[0].mxu0
    %v1160 = vadd.f32 %v1055, %v1159
    %v1161 = vpop.f32.mrb[0].mxu0
    %1162 = vmatprep.mubr.f32.mxu0 %v953
    %1163 = vmatmul.mubr.f32.gmra.mrb[0].mxu0 %v952
    %v1164 = vpop.f32.mrb[0].mxu0
    %v1165 = vadd.f32 %v1060, %v1164
    %v1166 = vpop.f32.mrb[0].mxu0
    %1167 = vmatprep.mubr.f32.mxu0 %v955
    %1168 = vmatmul.mubr.f32.gmra.mrb[0].mxu0 %v954
    %v1169 = vpop.f32.mrb[0].mxu0
    %v1170 = vadd.f32 %v1065, %v1169
    %v1171 = vpop.f32.mrb[0].mxu0
    %1172 = vmatprep.mubr.f32.mxu0 %v957
    %1173 = vmatmul.mubr.f32.gmra.mrb[0].mxu0 %v956
    %v1174 = vpop.f32.mrb[0].mxu0
    %v1175 = vadd.f32 %v1070, %v1174
    %v1176 = vpop.f32.mrb[0].mxu0
    %1177 = vmatprep.mubr.f32.mxu0 %v959
    %1178 = vmatmul.mubr.f32.gmra.mrb[0].mxu0 %v958
    %v1179 = vpop.f32.mrb[0].mxu0
    %v1180 = vadd.f32 %v1075, %v1179
    %v1181 = vpop.f32.mrb[0].mxu0
    %1182 = vmatprep.mubr.f32.mxu0 %v961
    %1183 = vmatmul.mubr.f32.gmra.mrb[0].mxu0 %v960
    %v1184 = vpop.f32.mrb[0].mxu0
    %v1185 = vadd.f32 %v1080, %v1184
    %v1186 = vpop.f32.mrb[0].mxu0
    %1187 = vdwg.mxu0
    %v1188 = vsub.f32 %v841, %v938
    %v1189 = vsub.f32 %v842, %v938
    %v1190 = vsub.f32 %v843, %v939
    %v1191 = vsub.f32 %v844, %v939
    %v1192 = vsub.f32 %v845, %v940
    %v1193 = vsub.f32 %v846, %v940
    %v1194 = vsub.f32 %v847, %v941
    %v1195 = vsub.f32 %v848, %v941
    %v1196 = vsub.f32 %v849, %v942
    %v1197 = vsub.f32 %v850, %v942
    %v1198 = vsub.f32 %v851, %v943
    %v1199 = vsub.f32 %v852, %v943
    %v1200 = vsub.f32 %v853, %v944
    %v1201 = vsub.f32 %v854, %v944
    %v1202 = vsub.f32 %v855, %v945
    %v1203 = vsub.f32 %v856, %v945
    %1204 = vmatprep.subr.mxu0 %v1189
    %1205 = vmatpush1.xpose.msra.mxu0 %v1188
    %1206 = vmatprep.subr.mxu0 %v1191
    %1207 = vmatpush1.xpose.msra.mxu0 %v1190
    %1208 = vmatprep.subr.mxu0 %v1193
    %1209 = vmatpush1.xpose.msra.mxu0 %v1192
    %1210 = vmatprep.subr.mxu0 %v1195
    %1211 = vmatpush1.xpose.msra.mxu0 %v1194
    %1212 = vmatprep.subr.mxu0 %v1197
    %1213 = vmatpush1.xpose.msra.mxu0 %v1196
    %1214 = vmatprep.subr.mxu0 %v1199
    %1215 = vmatpush1.xpose.msra.mxu0 %v1198
    %1216 = vmatprep.subr.mxu0 %v1201
    %1217 = vmatpush1.xpose.msra.mxu0 %v1200
    %1218 = vmatprep.subr.mxu0 %v1203
    %1219 = vmatpush1.xpose.msra.mxu0 %v1202
    %1220 = vmatprep.subr.mxu0 0.0
    %1221 = vmatpush1.xpose.msra.mxu0 0.0
    %1222 = vmatprep.subr.mxu0 0.0
    %1223 = vmatpush1.xpose.msra.mxu0 0.0
    %1224 = vmatprep.subr.mxu0 0.0
    %1225 = vmatpush1.xpose.msra.mxu0 0.0
    %1226 = vmatprep.subr.mxu0 0.0
    %1227 = vmatpush1.xpose.msra.mxu0 0.0
    %1228 = vmatprep.subr.mxu0 0.0
    %1229 = vmatpush1.xpose.msra.mxu0 0.0
    %1230 = vmatprep.subr.mxu0 0.0
    %1231 = vmatpush1.xpose.msra.mxu0 0.0
    %1232 = vmatprep.subr.mxu0 0.0
    %1233 = vmatpush1.xpose.msra.mxu0 0.0
    %1234 = vmatprep.subr.mxu0 0.0
    %1235 = vmatpush1.xpose.msra.mxu0 0.0
    %1236 = vmatprep.subr.mxu0 0.0
    %1237 = vmatpush1.xpose.msra.mxu0 0.0
    %1238 = vmatprep.subr.mxu0 0.0
    %1239 = vmatpush1.xpose.msra.mxu0 0.0
    %1240 = vmatprep.subr.mxu0 0.0
    %1241 = vmatpush1.xpose.msra.mxu0 0.0
    %1242 = vmatprep.subr.mxu0 0.0
    %1243 = vmatpush1.xpose.msra.mxu0 0.0
    %1244 = vmatprep.subr.mxu0 0.0
    %1245 = vmatpush1.xpose.msra.mxu0 0.0
    %1246 = vmatprep.subr.mxu0 0.0
    %1247 = vmatpush1.xpose.msra.mxu0 0.0
    %1248 = vmatprep.subr.mxu0 0.0
    %1249 = vmatpush1.xpose.msra.mxu0 0.0
    %1250 = vmatprep.subr.mxu0 0.0
    %1251 = vmatpush1.xpose.msra.mxu0 0.0
    %1252 = vmatprep.subr.mxu0 0.0
    %1253 = vmatpush1.xpose.msra.mxu0 0.0
    %1254 = vmatprep.subr.mxu0 0.0
    %1255 = vmatpush1.xpose.msra.mxu0 0.0
    %1256 = vmatprep.subr.mxu0 0.0
    %1257 = vmatpush1.xpose.msra.mxu0 0.0
    %1258 = vmatprep.subr.mxu0 0.0
    %1259 = vmatpush1.xpose.msra.mxu0 0.0
    %1260 = vmatprep.subr.mxu0 0.0
    %1261 = vmatpush1.xpose.msra.mxu0 0.0
    %1262 = vmatprep.subr.mxu0 0.0
    %1263 = vmatpush1.xpose.msra.mxu0 0.0
    %1264 = vmatprep.subr.mxu0 0.0
    %1265 = vmatpush1.xpose.msra.mxu0 0.0
    %1266 = vmatprep.subr.mxu0 0.0
    %1267 = vmatpush1.xpose.msra.mxu0 0.0
    %1268 = vmatprep.mubr.f32.mxu0 %v1189
    %1269 = vmatmul.mubr.f32.gmra.mrb[0].mxu0 %v1188
    %v1270 = vpop.f32.mrb[0].mxu0
    %v1271 = vadd.f32 0.0, %v1270
    %v1272 = vpop.f32.mrb[0].mxu0
    %1273 = vmatprep.mubr.f32.mxu0 %v1191
    %1274 = vmatmul.mubr.f32.gmra.mrb[0].mxu0 %v1190
    %v1275 = vpop.f32.mrb[0].mxu0
    %v1276 = vadd.f32 0.0, %v1275
    %v1277 = vpop.f32.mrb[0].mxu0
    %1278 = vmatprep.mubr.f32.mxu0 %v1193
    %1279 = vmatmul.mubr.f32.gmra.mrb[0].mxu0 %v1192
    %v1280 = vpop.f32.mrb[0].mxu0
    %v1281 = vadd.f32 0.0, %v1280
    %v1282 = vpop.f32.mrb[0].mxu0
    %1283 = vmatprep.mubr.f32.mxu0 %v1195
    %1284 = vmatmul.mubr.f32.gmra.mrb[0].mxu0 %v1194
    %v1285 = vpop.f32.mrb[0].mxu0
    %v1286 = vadd.f32 0.0, %v1285
    %v1287 = vpop.f32.mrb[0].mxu0
    %1288 = vmatprep.mubr.f32.mxu0 %v1197
    %1289 = vmatmul.mubr.f32.gmra.mrb[0].mxu0 %v1196
    %v1290 = vpop.f32.mrb[0].mxu0
    %v1291 = vadd.f32 0.0, %v1290
    %v1292 = vpop.f32.mrb[0].mxu0
    %1293 = vmatprep.mubr.f32.mxu0 %v1199
    %1294 = vmatmul.mubr.f32.gmra.mrb[0].mxu0 %v1198
    %v1295 = vpop.f32.mrb[0].mxu0
    %v1296 = vadd.f32 0.0, %v1295
    %v1297 = vpop.f32.mrb[0].mxu0
    %1298 = vmatprep.mubr.f32.mxu0 %v1201
    %1299 = vmatmul.mubr.f32.gmra.mrb[0].mxu0 %v1200
    %v1300 = vpop.f32.mrb[0].mxu0
    %v1301 = vadd.f32 0.0, %v1300
    %v1302 = vpop.f32.mrb[0].mxu0
    %1303 = vmatprep.mubr.f32.mxu0 %v1203
    %1304 = vmatmul.mubr.f32.gmra.mrb[0].mxu0 %v1202
    %v1305 = vpop.f32.mrb[0].mxu0
    %v1306 = vadd.f32 0.0, %v1305
    %v1307 = vpop.f32.mrb[0].mxu0
    %1308 = vdwg.mxu0
    %v1309 = vadd.f32 %v1150, %v1271
    %v1310 = vadd.f32 %v1155, %v1276
    %v1311 = vadd.f32 %v1160, %v1281
    %v1312 = vadd.f32 %v1165, %v1286
    %v1313 = vadd.f32 %v1170, %v1291
    %v1314 = vadd.f32 %v1175, %v1296
    %v1315 = vadd.f32 %v1180, %v1301
    %v1316 = vadd.f32 %v1185, %v1306
    %v1317 = vsub.f32 %v890, %v938
    %v1318 = vsub.f32 %v891, %v938
    %v1319 = vsub.f32 %v892, %v939
    %v1320 = vsub.f32 %v893, %v939
    %v1321 = vsub.f32 %v894, %v940
    %v1322 = vsub.f32 %v895, %v940
    %v1323 = vsub.f32 %v896, %v941
    %v1324 = vsub.f32 %v897, %v941
    %v1325 = vsub.f32 %v898, %v942
    %v1326 = vsub.f32 %v899, %v942
    %v1327 = vsub.f32 %v900, %v943
    %v1328 = vsub.f32 %v901, %v943
    %v1329 = vsub.f32 %v902, %v944
    %v1330 = vsub.f32 %v903, %v944
    %v1331 = vsub.f32 %v904, %v945
    %v1332 = vsub.f32 %v905, %v945
    %1333 = vmatprep.subr.mxu0 %v1318
    %1334 = vmatpush1.xpose.msra.mxu0 %v1317
    %1335 = vmatprep.subr.mxu0 %v1320
    %1336 = vmatpush1.xpose.msra.mxu0 %v1319
    %1337 = vmatprep.subr.mxu0 %v1322
    %1338 = vmatpush1.xpose.msra.mxu0 %v1321
    %1339 = vmatprep.subr.mxu0 %v1324
    %1340 = vmatpush1.xpose.msra.mxu0 %v1323
    %1341 = vmatprep.subr.mxu0 %v1326
    %1342 = vmatpush1.xpose.msra.mxu0 %v1325
    %1343 = vmatprep.subr.mxu0 %v1328
    %1344 = vmatpush1.xpose.msra.mxu0 %v1327
    %1345 = vmatprep.subr.mxu0 %v1330
    %1346 = vmatpush1.xpose.msra.mxu0 %v1329
    %1347 = vmatprep.subr.mxu0 %v1332
    %1348 = vmatpush1.xpose.msra.mxu0 %v1331
    %1349 = vmatprep.subr.mxu0 0.0
    %1350 = vmatpush1.xpose.msra.mxu0 0.0
    %1351 = vmatprep.subr.mxu0 0.0
    %1352 = vmatpush1.xpose.msra.mxu0 0.0
    %1353 = vmatprep.subr.mxu0 0.0
    %1354 = vmatpush1.xpose.msra.mxu0 0.0
    %1355 = vmatprep.subr.mxu0 0.0
    %1356 = vmatpush1.xpose.msra.mxu0 0.0
    %1357 = vmatprep.subr.mxu0 0.0
    %1358 = vmatpush1.xpose.msra.mxu0 0.0
    %1359 = vmatprep.subr.mxu0 0.0
    %1360 = vmatpush1.xpose.msra.mxu0 0.0
    %1361 = vmatprep.subr.mxu0 0.0
    %1362 = vmatpush1.xpose.msra.mxu0 0.0
    %1363 = vmatprep.subr.mxu0 0.0
    %1364 = vmatpush1.xpose.msra.mxu0 0.0
    %1365 = vmatprep.subr.mxu0 0.0
    %1366 = vmatpush1.xpose.msra.mxu0 0.0
    %1367 = vmatprep.subr.mxu0 0.0
    %1368 = vmatpush1.xpose.msra.mxu0 0.0
    %1369 = vmatprep.subr.mxu0 0.0
    %1370 = vmatpush1.xpose.msra.mxu0 0.0
    %1371 = vmatprep.subr.mxu0 0.0
    %1372 = vmatpush1.xpose.msra.mxu0 0.0
    %1373 = vmatprep.subr.mxu0 0.0
    %1374 = vmatpush1.xpose.msra.mxu0 0.0
    %1375 = vmatprep.subr.mxu0 0.0
    %1376 = vmatpush1.xpose.msra.mxu0 0.0
    %1377 = vmatprep.subr.mxu0 0.0
    %1378 = vmatpush1.xpose.msra.mxu0 0.0
    %1379 = vmatprep.subr.mxu0 0.0
    %1380 = vmatpush1.xpose.msra.mxu0 0.0
    %1381 = vmatprep.subr.mxu0 0.0
    %1382 = vmatpush1.xpose.msra.mxu0 0.0
    %1383 = vmatprep.subr.mxu0 0.0
    %1384 = vmatpush1.xpose.msra.mxu0 0.0
    %1385 = vmatprep.subr.mxu0 0.0
    %1386 = vmatpush1.xpose.msra.mxu0 0.0
    %1387 = vmatprep.subr.mxu0 0.0
    %1388 = vmatpush1.xpose.msra.mxu0 0.0
    %1389 = vmatprep.subr.mxu0 0.0
    %1390 = vmatpush1.xpose.msra.mxu0 0.0
    %1391 = vmatprep.subr.mxu0 0.0
    %1392 = vmatpush1.xpose.msra.mxu0 0.0
    %1393 = vmatprep.subr.mxu0 0.0
    %1394 = vmatpush1.xpose.msra.mxu0 0.0
    %1395 = vmatprep.subr.mxu0 0.0
    %1396 = vmatpush1.xpose.msra.mxu0 0.0
    %1397 = vmatprep.mubr.f32.mxu0 %v1318
    %1398 = vmatmul.mubr.f32.gmra.mrb[0].mxu0 %v1317
    %v1399 = vpop.f32.mrb[0].mxu0
    %v1400 = vadd.f32 0.0, %v1399
    %v1401 = vpop.f32.mrb[0].mxu0
    %1402 = vmatprep.mubr.f32.mxu0 %v1320
    %1403 = vmatmul.mubr.f32.gmra.mrb[0].mxu0 %v1319
    %v1404 = vpop.f32.mrb[0].mxu0
    %v1405 = vadd.f32 0.0, %v1404
    %v1406 = vpop.f32.mrb[0].mxu0
    %1407 = vmatprep.mubr.f32.mxu0 %v1322
    %1408 = vmatmul.mubr.f32.gmra.mrb[0].mxu0 %v1321
    %v1409 = vpop.f32.mrb[0].mxu0
    %v1410 = vadd.f32 0.0, %v1409
    %v1411 = vpop.f32.mrb[0].mxu0
    %1412 = vmatprep.mubr.f32.mxu0 %v1324
    %1413 = vmatmul.mubr.f32.gmra.mrb[0].mxu0 %v1323
    %v1414 = vpop.f32.mrb[0].mxu0
    %v1415 = vadd.f32 0.0, %v1414
    %v1416 = vpop.f32.mrb[0].mxu0
    %1417 = vmatprep.mubr.f32.mxu0 %v1326
    %1418 = vmatmul.mubr.f32.gmra.mrb[0].mxu0 %v1325
    %v1419 = vpop.f32.mrb[0].mxu0
    %v1420 = vadd.f32 0.0, %v1419
    %v1421 = vpop.f32.mrb[0].mxu0
    %1422 = vmatprep.mubr.f32.mxu0 %v1328
    %1423 = vmatmul.mubr.f32.gmra.mrb[0].mxu0 %v1327
    %v1424 = vpop.f32.mrb[0].mxu0
    %v1425 = vadd.f32 0.0, %v1424
    %v1426 = vpop.f32.mrb[0].mxu0
    %1427 = vmatprep.mubr.f32.mxu0 %v1330
    %1428 = vmatmul.mubr.f32.gmra.mrb[0].mxu0 %v1329
    %v1429 = vpop.f32.mrb[0].mxu0
    %v1430 = vadd.f32 0.0, %v1429
    %v1431 = vpop.f32.mrb[0].mxu0
    %1432 = vmatprep.mubr.f32.mxu0 %v1332
    %1433 = vmatmul.mubr.f32.gmra.mrb[0].mxu0 %v1331
    %v1434 = vpop.f32.mrb[0].mxu0
    %v1435 = vadd.f32 0.0, %v1434
    %v1436 = vpop.f32.mrb[0].mxu0
    %1437 = vdwg.mxu0
    %v1438 = vadd.f32 %v1309, %v1400
    %v1439 = vadd.f32 %v1310, %v1405
    %v1440 = vadd.f32 %v1311, %v1410
    %v1441 = vadd.f32 %v1312, %v1415
    %v1442 = vadd.f32 %v1313, %v1420
    %v1443 = vadd.f32 %v1314, %v1425
    %v1444 = vadd.f32 %v1315, %v1430
    %v1445 = vadd.f32 %v1316, %v1435
    %v1446 = vmul.f32 %v1438, 0.0009775171
    %v1447 = vmul.f32 %v1439, 0.0009775171
    %v1448 = vmul.f32 %v1440, 0.0009775171
    %v1449 = vmul.f32 %v1441, 0.0009775171
    %v1450 = vmul.f32 %v1442, 0.0009775171
    %v1451 = vmul.f32 %v1443, 0.0009775171
    %v1452 = vmul.f32 %v1444, 0.0009775171
    %v1453 = vmul.f32 %v1445, 0.0009775171
    %1454 = vst.msk [vmem:[%s1 + $0x40] sm:$0xff] %vm733, %v1446
    %1455 = vst.msk [vmem:[%s1 + $0x48] sm:$0xff] %vm733, %v1447
    %1456 = vst.msk [vmem:[%s1 + $0x50] sm:$0xff] %vm733, %v1448
    %1457 = vst.msk [vmem:[%s1 + $0x58] sm:$0xff] %vm733, %v1449
    %1458 = vst.msk [vmem:[%s1 + $0x60] sm:$0xff] %vm733, %v1450
    %1459 = vst.msk [vmem:[%s1 + $0x68] sm:$0xff] %vm733, %v1451
    %1460 = vst.msk [vmem:[%s1 + $0x70] sm:$0xff] %vm733, %v1452
    %1461 = vst.msk [vmem:[%s1 + $0x78] sm:$0xff] %vm733, %v1453
    %s1462 = scalar_lea.vmem [#allocation2], 1024
    %v1463 = vld [vmem:[%s1462] sm:$0xff]
    %v1464 = vld [vmem:[%s1462 + $0x8] sm:$0xff]
    %v1465 = vld [vmem:[%s1462 + $0x10] sm:$0xff]
    %v1466 = vld [vmem:[%s1462 + $0x18] sm:$0xff]
    %v1467 = vld [vmem:[%s1462 + $0x20] sm:$0xff]
    %v1468 = vld [vmem:[%s1462 + $0x28] sm:$0xff]
    %v1469 = vld [vmem:[%s1462 + $0x30] sm:$0xff]
    %v1470 = vld [vmem:[%s1462 + $0x38] sm:$0xff]
    %v1471 = vld [vmem:[%s1462 + $0x40] sm:$0xff]
    %v1472 = vld [vmem:[%s1462 + $0x48] sm:$0xff]
    %v1473 = vld [vmem:[%s1462 + $0x50] sm:$0xff]
    %v1474 = vld [vmem:[%s1462 + $0x58] sm:$0xff]
    %v1475 = vld [vmem:[%s1462 + $0x60] sm:$0xff]
    %v1476 = vld [vmem:[%s1462 + $0x68] sm:$0xff]
    %v1477 = vld [vmem:[%s1462 + $0x70] sm:$0xff]
    %v1478 = vld [vmem:[%s1462 + $0x78] sm:$0xff]
    %v1479 = vadd.f32 %v1463, %v1464
    %1480 = vadd.xlane.f32.xlu0 %v1479
    %v1481 = vpop.xlane.xlu0 %1480
    %v1482 = vadd.f32 %v1465, %v1466
    %1483 = vadd.xlane.f32.xlu0 %v1482
    %v1484 = vpop.xlane.xlu0 %1483
    %v1485 = vadd.f32 %v1467, %v1468
    %1486 = vadd.xlane.f32.xlu0 %v1485
    %v1487 = vpop.xlane.xlu0 %1486
    %v1488 = vadd.f32 %v1469, %v1470
    %1489 = vadd.xlane.f32.xlu0 %v1488
    %v1490 = vpop.xlane.xlu0 %1489
    %v1491 = vadd.f32 %v1471, %v1472
    %1492 = vadd.xlane.f32.xlu0 %v1491
    %v1493 = vpop.xlane.xlu0 %1492
    %v1494 = vadd.f32 %v1473, %v1474
    %1495 = vadd.xlane.f32.xlu0 %v1494
    %v1496 = vpop.xlane.xlu0 %1495
    %v1497 = vadd.f32 %v1475, %v1476
    %1498 = vadd.xlane.f32.xlu0 %v1497
    %v1499 = vpop.xlane.xlu0 %1498
    %v1500 = vadd.f32 %v1477, %v1478
    %1501 = vadd.xlane.f32.xlu0 %v1500
    %v1502 = vpop.xlane.xlu0 %1501
    %v1503 = vadd.f32 %v1481, 0.0
    %v1504 = vadd.f32 %v1484, 0.0
    %v1505 = vadd.f32 %v1487, 0.0
    %v1506 = vadd.f32 %v1490, 0.0
    %v1507 = vadd.f32 %v1493, 0.0
    %v1508 = vadd.f32 %v1496, 0.0
    %v1509 = vadd.f32 %v1499, 0.0
    %v1510 = vadd.f32 %v1502, 0.0
    %s1511 = scalar_lea.vmem [#allocation2], 1152
    %v1512 = vld [vmem:[%s1511] sm:$0xff]
    %v1513 = vld [vmem:[%s1511 + $0x8] sm:$0xff]
    %v1514 = vld [vmem:[%s1511 + $0x10] sm:$0xff]
    %v1515 = vld [vmem:[%s1511 + $0x18] sm:$0xff]
    %v1516 = vld [vmem:[%s1511 + $0x20] sm:$0xff]
    %v1517 = vld [vmem:[%s1511 + $0x28] sm:$0xff]
    %v1518 = vld [vmem:[%s1511 + $0x30] sm:$0xff]
    %v1519 = vld [vmem:[%s1511 + $0x38] sm:$0xff]
    %v1520 = vld [vmem:[%s1511 + $0x40] sm:$0xff]
    %v1521 = vld [vmem:[%s1511 + $0x48] sm:$0xff]
    %v1522 = vld [vmem:[%s1511 + $0x50] sm:$0xff]
    %v1523 = vld [vmem:[%s1511 + $0x58] sm:$0xff]
    %v1524 = vld [vmem:[%s1511 + $0x60] sm:$0xff]
    %v1525 = vld [vmem:[%s1511 + $0x68] sm:$0xff]
    %v1526 = vld [vmem:[%s1511 + $0x70] sm:$0xff]
    %v1527 = vld [vmem:[%s1511 + $0x78] sm:$0xff]
    %v1528 = vadd.f32 %v1512, %v1513
    %1529 = vadd.xlane.f32.xlu0 %v1528
    %v1530 = vpop.xlane.xlu0 %1529
    %v1531 = vadd.f32 %v1514, %v1515
    %1532 = vadd.xlane.f32.xlu0 %v1531
    %v1533 = vpop.xlane.xlu0 %1532
    %v1534 = vadd.f32 %v1516, %v1517
    %1535 = vadd.xlane.f32.xlu0 %v1534
    %v1536 = vpop.xlane.xlu0 %1535
    %v1537 = vadd.f32 %v1518, %v1519
    %1538 = vadd.xlane.f32.xlu0 %v1537
    %v1539 = vpop.xlane.xlu0 %1538
    %v1540 = vadd.f32 %v1520, %v1521
    %1541 = vadd.xlane.f32.xlu0 %v1540
    %v1542 = vpop.xlane.xlu0 %1541
    %v1543 = vadd.f32 %v1522, %v1523
    %1544 = vadd.xlane.f32.xlu0 %v1543
    %v1545 = vpop.xlane.xlu0 %1544
    %v1546 = vadd.f32 %v1524, %v1525
    %1547 = vadd.xlane.f32.xlu0 %v1546
    %v1548 = vpop.xlane.xlu0 %1547
    %v1549 = vadd.f32 %v1526, %v1527
    %1550 = vadd.xlane.f32.xlu0 %v1549
    %v1551 = vpop.xlane.xlu0 %1550
    %v1552 = vadd.f32 %v1503, %v1530
    %v1553 = vadd.f32 %v1504, %v1533
    %v1554 = vadd.f32 %v1505, %v1536
    %v1555 = vadd.f32 %v1506, %v1539
    %v1556 = vadd.f32 %v1507, %v1542
    %v1557 = vadd.f32 %v1508, %v1545
    %v1558 = vadd.f32 %v1509, %v1548
    %v1559 = vadd.f32 %v1510, %v1551
    %s1560 = scalar_lea.vmem [#allocation2], 1280
    %v1561 = vld [vmem:[%s1560] sm:$0xff]
    %v1562 = vld [vmem:[%s1560 + $0x8] sm:$0xff]
    %v1563 = vld [vmem:[%s1560 + $0x10] sm:$0xff]
    %v1564 = vld [vmem:[%s1560 + $0x18] sm:$0xff]
    %v1565 = vld [vmem:[%s1560 + $0x20] sm:$0xff]
    %v1566 = vld [vmem:[%s1560 + $0x28] sm:$0xff]
    %v1567 = vld [vmem:[%s1560 + $0x30] sm:$0xff]
    %v1568 = vld [vmem:[%s1560 + $0x38] sm:$0xff]
    %v1569 = vld [vmem:[%s1560 + $0x40] sm:$0xff]
    %v1570 = vld [vmem:[%s1560 + $0x48] sm:$0xff]
    %v1571 = vld [vmem:[%s1560 + $0x50] sm:$0xff]
    %v1572 = vld [vmem:[%s1560 + $0x58] sm:$0xff]
    %v1573 = vld [vmem:[%s1560 + $0x60] sm:$0xff]
    %v1574 = vld [vmem:[%s1560 + $0x68] sm:$0xff]
    %v1575 = vld [vmem:[%s1560 + $0x70] sm:$0xff]
    %v1576 = vld [vmem:[%s1560 + $0x78] sm:$0xff]
    %v1577 = vadd.f32 %v1561, %v1562
    %1578 = vadd.xlane.f32.xlu0 %v1577
    %v1579 = vpop.xlane.xlu0 %1578
    %v1580 = vadd.f32 %v1563, %v1564
    %1581 = vadd.xlane.f32.xlu0 %v1580
    %v1582 = vpop.xlane.xlu0 %1581
    %v1583 = vadd.f32 %v1565, %v1566
    %1584 = vadd.xlane.f32.xlu0 %v1583
    %v1585 = vpop.xlane.xlu0 %1584
    %v1586 = vadd.f32 %v1567, %v1568
    %1587 = vadd.xlane.f32.xlu0 %v1586
    %v1588 = vpop.xlane.xlu0 %1587
    %v1589 = vadd.f32 %v1569, %v1570
    %1590 = vadd.xlane.f32.xlu0 %v1589
    %v1591 = vpop.xlane.xlu0 %1590
    %v1592 = vadd.f32 %v1571, %v1572
    %1593 = vadd.xlane.f32.xlu0 %v1592
    %v1594 = vpop.xlane.xlu0 %1593
    %v1595 = vadd.f32 %v1573, %v1574
    %1596 = vadd.xlane.f32.xlu0 %v1595
    %v1597 = vpop.xlane.xlu0 %1596
    %v1598 = vadd.f32 %v1575, %v1576
    %1599 = vadd.xlane.f32.xlu0 %v1598
    %v1600 = vpop.xlane.xlu0 %1599
    %v1601 = vadd.f32 %v1552, %v1579
    %v1602 = vadd.f32 %v1553, %v1582
    %v1603 = vadd.f32 %v1554, %v1585
    %v1604 = vadd.f32 %v1555, %v1588
    %v1605 = vadd.f32 %v1556, %v1591
    %v1606 = vadd.f32 %v1557, %v1594
    %v1607 = vadd.f32 %v1558, %v1597
    %v1608 = vadd.f32 %v1559, %v1600
    %s1609 = scalar_lea.vmem [#allocation2], 1408
    %v1610 = vld [vmem:[%s1609] sm:$0xff]
    %v1611 = vld [vmem:[%s1609 + $0x8] sm:$0xff]
    %v1612 = vld [vmem:[%s1609 + $0x10] sm:$0xff]
    %v1613 = vld [vmem:[%s1609 + $0x18] sm:$0xff]
    %v1614 = vld [vmem:[%s1609 + $0x20] sm:$0xff]
    %v1615 = vld [vmem:[%s1609 + $0x28] sm:$0xff]
    %v1616 = vld [vmem:[%s1609 + $0x30] sm:$0xff]
    %v1617 = vld [vmem:[%s1609 + $0x38] sm:$0xff]
    %v1618 = vld [vmem:[%s1609 + $0x40] sm:$0xff]
    %v1619 = vld [vmem:[%s1609 + $0x48] sm:$0xff]
    %v1620 = vld [vmem:[%s1609 + $0x50] sm:$0xff]
    %v1621 = vld [vmem:[%s1609 + $0x58] sm:$0xff]
    %v1622 = vld [vmem:[%s1609 + $0x60] sm:$0xff]
    %v1623 = vld [vmem:[%s1609 + $0x68] sm:$0xff]
    %v1624 = vld [vmem:[%s1609 + $0x70] sm:$0xff]
    %v1625 = vld [vmem:[%s1609 + $0x78] sm:$0xff]
    %v1626 = vadd.f32 %v1610, %v1611
    %1627 = vadd.xlane.f32.xlu0 %v1626
    %v1628 = vpop.xlane.xlu0 %1627
    %v1629 = vadd.f32 %v1612, %v1613
    %1630 = vadd.xlane.f32.xlu0 %v1629
    %v1631 = vpop.xlane.xlu0 %1630
    %v1632 = vadd.f32 %v1614, %v1615
    %1633 = vadd.xlane.f32.xlu0 %v1632
    %v1634 = vpop.xlane.xlu0 %1633
    %v1635 = vadd.f32 %v1616, %v1617
    %1636 = vadd.xlane.f32.xlu0 %v1635
    %v1637 = vpop.xlane.xlu0 %1636
    %v1638 = vadd.f32 %v1618, %v1619
    %1639 = vadd.xlane.f32.xlu0 %v1638
    %v1640 = vpop.xlane.xlu0 %1639
    %v1641 = vadd.f32 %v1620, %v1621
    %1642 = vadd.xlane.f32.xlu0 %v1641
    %v1643 = vpop.xlane.xlu0 %1642
    %v1644 = vadd.f32 %v1622, %v1623
    %1645 = vadd.xlane.f32.xlu0 %v1644
    %v1646 = vpop.xlane.xlu0 %1645
    %v1647 = vadd.f32 %v1624, %v1625
    %1648 = vadd.xlane.f32.xlu0 %v1647
    %v1649 = vpop.xlane.xlu0 %1648
    %v1650 = vadd.f32 %v1601, %v1628
    %v1651 = vadd.f32 %v1602, %v1631
    %v1652 = vadd.f32 %v1603, %v1634
    %v1653 = vadd.f32 %v1604, %v1637
    %v1654 = vadd.f32 %v1605, %v1640
    %v1655 = vadd.f32 %v1606, %v1643
    %v1656 = vadd.f32 %v1607, %v1646
    %v1657 = vadd.f32 %v1608, %v1649
    %v1658 = vmul.f32 %v1650, 0.0009765625
    %v1659 = vmul.f32 %v1651, 0.0009765625
    %v1660 = vmul.f32 %v1652, 0.0009765625
    %v1661 = vmul.f32 %v1653, 0.0009765625
    %v1662 = vmul.f32 %v1654, 0.0009765625
    %v1663 = vmul.f32 %v1655, 0.0009765625
    %v1664 = vmul.f32 %v1656, 0.0009765625
    %v1665 = vmul.f32 %v1657, 0.0009765625
    %v1666 = vsub.f32 %v1463, %v1658
    %v1667 = vsub.f32 %v1464, %v1658
    %v1668 = vsub.f32 %v1465, %v1659
    %v1669 = vsub.f32 %v1466, %v1659
    %v1670 = vsub.f32 %v1467, %v1660
    %v1671 = vsub.f32 %v1468, %v1660
    %v1672 = vsub.f32 %v1469, %v1661
    %v1673 = vsub.f32 %v1470, %v1661
    %v1674 = vsub.f32 %v1471, %v1662
    %v1675 = vsub.f32 %v1472, %v1662
    %v1676 = vsub.f32 %v1473, %v1663
    %v1677 = vsub.f32 %v1474, %v1663
    %v1678 = vsub.f32 %v1475, %v1664
    %v1679 = vsub.f32 %v1476, %v1664
    %v1680 = vsub.f32 %v1477, %v1665
    %v1681 = vsub.f32 %v1478, %v1665
    %v1682 = vsub.f32 %v1512, %v1658
    %v1683 = vsub.f32 %v1513, %v1658
    %v1684 = vsub.f32 %v1514, %v1659
    %v1685 = vsub.f32 %v1515, %v1659
    %v1686 = vsub.f32 %v1516, %v1660
    %v1687 = vsub.f32 %v1517, %v1660
    %v1688 = vsub.f32 %v1518, %v1661
    %v1689 = vsub.f32 %v1519, %v1661
    %v1690 = vsub.f32 %v1520, %v1662
    %v1691 = vsub.f32 %v1521, %v1662
    %v1692 = vsub.f32 %v1522, %v1663
    %v1693 = vsub.f32 %v1523, %v1663
    %v1694 = vsub.f32 %v1524, %v1664
    %v1695 = vsub.f32 %v1525, %v1664
    %v1696 = vsub.f32 %v1526, %v1665
    %v1697 = vsub.f32 %v1527, %v1665
    %1698 = vmatprep.subr.mxu0 %v1683
    %1699 = vmatpush1.xpose.msra.mxu0 %v1682
    %1700 = vmatprep.subr.mxu0 %v1685
    %1701 = vmatpush1.xpose.msra.mxu0 %v1684
    %1702 = vmatprep.subr.mxu0 %v1687
    %1703 = vmatpush1.xpose.msra.mxu0 %v1686
    %1704 = vmatprep.subr.mxu0 %v1689
    %1705 = vmatpush1.xpose.msra.mxu0 %v1688
    %1706 = vmatprep.subr.mxu0 %v1691
    %1707 = vmatpush1.xpose.msra.mxu0 %v1690
    %1708 = vmatprep.subr.mxu0 %v1693
    %1709 = vmatpush1.xpose.msra.mxu0 %v1692
    %1710 = vmatprep.subr.mxu0 %v1695
    %1711 = vmatpush1.xpose.msra.mxu0 %v1694
    %1712 = vmatprep.subr.mxu0 %v1697
    %1713 = vmatpush1.xpose.msra.mxu0 %v1696
    %1714 = vmatprep.subr.mxu0 0.0
    %1715 = vmatpush1.xpose.msra.mxu0 0.0
    %1716 = vmatprep.subr.mxu0 0.0
    %1717 = vmatpush1.xpose.msra.mxu0 0.0
    %1718 = vmatprep.subr.mxu0 0.0
    %1719 = vmatpush1.xpose.msra.mxu0 0.0
    %1720 = vmatprep.subr.mxu0 0.0
    %1721 = vmatpush1.xpose.msra.mxu0 0.0
    %1722 = vmatprep.subr.mxu0 0.0
    %1723 = vmatpush1.xpose.msra.mxu0 0.0
    %1724 = vmatprep.subr.mxu0 0.0
    %1725 = vmatpush1.xpose.msra.mxu0 0.0
    %1726 = vmatprep.subr.mxu0 0.0
    %1727 = vmatpush1.xpose.msra.mxu0 0.0
    %1728 = vmatprep.subr.mxu0 0.0
    %1729 = vmatpush1.xpose.msra.mxu0 0.0
    %1730 = vmatprep.subr.mxu0 0.0
    %1731 = vmatpush1.xpose.msra.mxu0 0.0
    %1732 = vmatprep.subr.mxu0 0.0
    %1733 = vmatpush1.xpose.msra.mxu0 0.0
    %1734 = vmatprep.subr.mxu0 0.0
    %1735 = vmatpush1.xpose.msra.mxu0 0.0
    %1736 = vmatprep.subr.mxu0 0.0
    %1737 = vmatpush1.xpose.msra.mxu0 0.0
    %1738 = vmatprep.subr.mxu0 0.0
    %1739 = vmatpush1.xpose.msra.mxu0 0.0
    %1740 = vmatprep.subr.mxu0 0.0
    %1741 = vmatpush1.xpose.msra.mxu0 0.0
    %1742 = vmatprep.subr.mxu0 0.0
    %1743 = vmatpush1.xpose.msra.mxu0 0.0
    %1744 = vmatprep.subr.mxu0 0.0
    %1745 = vmatpush1.xpose.msra.mxu0 0.0
    %1746 = vmatprep.subr.mxu0 0.0
    %1747 = vmatpush1.xpose.msra.mxu0 0.0
    %1748 = vmatprep.subr.mxu0 0.0
    %1749 = vmatpush1.xpose.msra.mxu0 0.0
    %1750 = vmatprep.subr.mxu0 0.0
    %1751 = vmatpush1.xpose.msra.mxu0 0.0
    %1752 = vmatprep.subr.mxu0 0.0
    %1753 = vmatpush1.xpose.msra.mxu0 0.0
    %1754 = vmatprep.subr.mxu0 0.0
    %1755 = vmatpush1.xpose.msra.mxu0 0.0
    %1756 = vmatprep.subr.mxu0 0.0
    %1757 = vmatpush1.xpose.msra.mxu0 0.0
    %1758 = vmatprep.subr.mxu0 0.0
    %1759 = vmatpush1.xpose.msra.mxu0 0.0
    %1760 = vmatprep.subr.mxu0 0.0
    %1761 = vmatpush1.xpose.msra.mxu0 0.0
    %1762 = vmatprep.mubr.f32.mxu0 %v1683
    %1763 = vmatmul.mubr.f32.gmra.mrb[0].mxu0 %v1682
    %v1764 = vpop.f32.mrb[0].mxu0
    %v1765 = vadd.f32 0.0, %v1764
    %v1766 = vpop.f32.mrb[0].mxu0
    %1767 = vmatprep.mubr.f32.mxu0 %v1685
    %1768 = vmatmul.mubr.f32.gmra.mrb[0].mxu0 %v1684
    %v1769 = vpop.f32.mrb[0].mxu0
    %v1770 = vadd.f32 0.0, %v1769
    %v1771 = vpop.f32.mrb[0].mxu0
    %1772 = vmatprep.mubr.f32.mxu0 %v1687
    %1773 = vmatmul.mubr.f32.gmra.mrb[0].mxu0 %v1686
    %v1774 = vpop.f32.mrb[0].mxu0
    %v1775 = vadd.f32 0.0, %v1774
    %v1776 = vpop.f32.mrb[0].mxu0
    %1777 = vmatprep.mubr.f32.mxu0 %v1689
    %1778 = vmatmul.mubr.f32.gmra.mrb[0].mxu0 %v1688
    %v1779 = vpop.f32.mrb[0].mxu0
    %v1780 = vadd.f32 0.0, %v1779
    %v1781 = vpop.f32.mrb[0].mxu0
    %1782 = vmatprep.mubr.f32.mxu0 %v1691
    %1783 = vmatmul.mubr.f32.gmra.mrb[0].mxu0 %v1690
    %v1784 = vpop.f32.mrb[0].mxu0
    %v1785 = vadd.f32 0.0, %v1784
    %v1786 = vpop.f32.mrb[0].mxu0
    %1787 = vmatprep.mubr.f32.mxu0 %v1693
    %1788 = vmatmul.mubr.f32.gmra.mrb[0].mxu0 %v1692
    %v1789 = vpop.f32.mrb[0].mxu0
    %v1790 = vadd.f32 0.0, %v1789
    %v1791 = vpop.f32.mrb[0].mxu0
    %1792 = vmatprep.mubr.f32.mxu0 %v1695
    %1793 = vmatmul.mubr.f32.gmra.mrb[0].mxu0 %v1694
    %v1794 = vpop.f32.mrb[0].mxu0
    %v1795 = vadd.f32 0.0, %v1794
    %v1796 = vpop.f32.mrb[0].mxu0
    %1797 = vmatprep.mubr.f32.mxu0 %v1697
    %1798 = vmatmul.mubr.f32.gmra.mrb[0].mxu0 %v1696
    %v1799 = vpop.f32.mrb[0].mxu0
    %v1800 = vadd.f32 0.0, %v1799
    %v1801 = vpop.f32.mrb[0].mxu0
    %1802 = vdwg.mxu0
    %1803 = vmatprep.subr.mxu0 %v1667
    %1804 = vmatpush1.xpose.msra.mxu0 %v1666
    %1805 = vmatprep.subr.mxu0 %v1669
    %1806 = vmatpush1.xpose.msra.mxu0 %v1668
    %1807 = vmatprep.subr.mxu0 %v1671
    %1808 = vmatpush1.xpose.msra.mxu0 %v1670
    %1809 = vmatprep.subr.mxu0 %v1673
    %1810 = vmatpush1.xpose.msra.mxu0 %v1672
    %1811 = vmatprep.subr.mxu0 %v1675
    %1812 = vmatpush1.xpose.msra.mxu0 %v1674
    %1813 = vmatprep.subr.mxu0 %v1677
    %1814 = vmatpush1.xpose.msra.mxu0 %v1676
    %1815 = vmatprep.subr.mxu0 %v1679
    %1816 = vmatpush1.xpose.msra.mxu0 %v1678
    %1817 = vmatprep.subr.mxu0 %v1681
    %1818 = vmatpush1.xpose.msra.mxu0 %v1680
    %1819 = vmatprep.subr.mxu0 0.0
    %1820 = vmatpush1.xpose.msra.mxu0 0.0
    %1821 = vmatprep.subr.mxu0 0.0
    %1822 = vmatpush1.xpose.msra.mxu0 0.0
    %1823 = vmatprep.subr.mxu0 0.0
    %1824 = vmatpush1.xpose.msra.mxu0 0.0
    %1825 = vmatprep.subr.mxu0 0.0
    %1826 = vmatpush1.xpose.msra.mxu0 0.0
    %1827 = vmatprep.subr.mxu0 0.0
    %1828 = vmatpush1.xpose.msra.mxu0 0.0
    %1829 = vmatprep.subr.mxu0 0.0
    %1830 = vmatpush1.xpose.msra.mxu0 0.0
    %1831 = vmatprep.subr.mxu0 0.0
    %1832 = vmatpush1.xpose.msra.mxu0 0.0
    %1833 = vmatprep.subr.mxu0 0.0
    %1834 = vmatpush1.xpose.msra.mxu0 0.0
    %1835 = vmatprep.subr.mxu0 0.0
    %1836 = vmatpush1.xpose.msra.mxu0 0.0
    %1837 = vmatprep.subr.mxu0 0.0
    %1838 = vmatpush1.xpose.msra.mxu0 0.0
    %1839 = vmatprep.subr.mxu0 0.0
    %1840 = vmatpush1.xpose.msra.mxu0 0.0
    %1841 = vmatprep.subr.mxu0 0.0
    %1842 = vmatpush1.xpose.msra.mxu0 0.0
    %1843 = vmatprep.subr.mxu0 0.0
    %1844 = vmatpush1.xpose.msra.mxu0 0.0
    %1845 = vmatprep.subr.mxu0 0.0
    %1846 = vmatpush1.xpose.msra.mxu0 0.0
    %1847 = vmatprep.subr.mxu0 0.0
    %1848 = vmatpush1.xpose.msra.mxu0 0.0
    %1849 = vmatprep.subr.mxu0 0.0
    %1850 = vmatpush1.xpose.msra.mxu0 0.0
    %1851 = vmatprep.subr.mxu0 0.0
    %1852 = vmatpush1.xpose.msra.mxu0 0.0
    %1853 = vmatprep.subr.mxu0 0.0
    %1854 = vmatpush1.xpose.msra.mxu0 0.0
    %1855 = vmatprep.subr.mxu0 0.0
    %1856 = vmatpush1.xpose.msra.mxu0 0.0
    %1857 = vmatprep.subr.mxu0 0.0
    %1858 = vmatpush1.xpose.msra.mxu0 0.0
    %1859 = vmatprep.subr.mxu0 0.0
    %1860 = vmatpush1.xpose.msra.mxu0 0.0
    %1861 = vmatprep.subr.mxu0 0.0
    %1862 = vmatpush1.xpose.msra.mxu0 0.0
    %1863 = vmatprep.subr.mxu0 0.0
    %1864 = vmatpush1.xpose.msra.mxu0 0.0
    %1865 = vmatprep.subr.mxu0 0.0
    %1866 = vmatpush1.xpose.msra.mxu0 0.0
    %1867 = vmatprep.mubr.f32.mxu0 %v1667
    %1868 = vmatmul.mubr.f32.gmra.mrb[0].mxu0 %v1666
    %v1869 = vpop.f32.mrb[0].mxu0
    %v1870 = vadd.f32 %v1765, %v1869
    %v1871 = vpop.f32.mrb[0].mxu0
    %1872 = vmatprep.mubr.f32.mxu0 %v1669
    %1873 = vmatmul.mubr.f32.gmra.mrb[0].mxu0 %v1668
    %v1874 = vpop.f32.mrb[0].mxu0
    %v1875 = vadd.f32 %v1770, %v1874
    %v1876 = vpop.f32.mrb[0].mxu0
    %1877 = vmatprep.mubr.f32.mxu0 %v1671
    %1878 = vmatmul.mubr.f32.gmra.mrb[0].mxu0 %v1670
    %v1879 = vpop.f32.mrb[0].mxu0
    %v1880 = vadd.f32 %v1775, %v1879
    %v1881 = vpop.f32.mrb[0].mxu0
    %1882 = vmatprep.mubr.f32.mxu0 %v1673
    %1883 = vmatmul.mubr.f32.gmra.mrb[0].mxu0 %v1672
    %v1884 = vpop.f32.mrb[0].mxu0
    %v1885 = vadd.f32 %v1780, %v1884
    %v1886 = vpop.f32.mrb[0].mxu0
    %1887 = vmatprep.mubr.f32.mxu0 %v1675
    %1888 = vmatmul.mubr.f32.gmra.mrb[0].mxu0 %v1674
    %v1889 = vpop.f32.mrb[0].mxu0
    %v1890 = vadd.f32 %v1785, %v1889
    %v1891 = vpop.f32.mrb[0].mxu0
    %1892 = vmatprep.mubr.f32.mxu0 %v1677
    %1893 = vmatmul.mubr.f32.gmra.mrb[0].mxu0 %v1676
    %v1894 = vpop.f32.mrb[0].mxu0
    %v1895 = vadd.f32 %v1790, %v1894
    %v1896 = vpop.f32.mrb[0].mxu0
    %1897 = vmatprep.mubr.f32.mxu0 %v1679
    %1898 = vmatmul.mubr.f32.gmra.mrb[0].mxu0 %v1678
    %v1899 = vpop.f32.mrb[0].mxu0
    %v1900 = vadd.f32 %v1795, %v1899
    %v1901 = vpop.f32.mrb[0].mxu0
    %1902 = vmatprep.mubr.f32.mxu0 %v1681
    %1903 = vmatmul.mubr.f32.gmra.mrb[0].mxu0 %v1680
    %v1904 = vpop.f32.mrb[0].mxu0
    %v1905 = vadd.f32 %v1800, %v1904
    %v1906 = vpop.f32.mrb[0].mxu0
    %1907 = vdwg.mxu0
    %v1908 = vsub.f32 %v1561, %v1658
    %v1909 = vsub.f32 %v1562, %v1658
    %v1910 = vsub.f32 %v1563, %v1659
    %v1911 = vsub.f32 %v1564, %v1659
    %v1912 = vsub.f32 %v1565, %v1660
    %v1913 = vsub.f32 %v1566, %v1660
    %v1914 = vsub.f32 %v1567, %v1661
    %v1915 = vsub.f32 %v1568, %v1661
    %v1916 = vsub.f32 %v1569, %v1662
    %v1917 = vsub.f32 %v1570, %v1662
    %v1918 = vsub.f32 %v1571, %v1663
    %v1919 = vsub.f32 %v1572, %v1663
    %v1920 = vsub.f32 %v1573, %v1664
    %v1921 = vsub.f32 %v1574, %v1664
    %v1922 = vsub.f32 %v1575, %v1665
    %v1923 = vsub.f32 %v1576, %v1665
    %1924 = vmatprep.subr.mxu0 %v1909
    %1925 = vmatpush1.xpose.msra.mxu0 %v1908
    %1926 = vmatprep.subr.mxu0 %v1911
    %1927 = vmatpush1.xpose.msra.mxu0 %v1910
    %1928 = vmatprep.subr.mxu0 %v1913
    %1929 = vmatpush1.xpose.msra.mxu0 %v1912
    %1930 = vmatprep.subr.mxu0 %v1915
    %1931 = vmatpush1.xpose.msra.mxu0 %v1914
    %1932 = vmatprep.subr.mxu0 %v1917
    %1933 = vmatpush1.xpose.msra.mxu0 %v1916
    %1934 = vmatprep.subr.mxu0 %v1919
    %1935 = vmatpush1.xpose.msra.mxu0 %v1918
    %1936 = vmatprep.subr.mxu0 %v1921
    %1937 = vmatpush1.xpose.msra.mxu0 %v1920
    %1938 = vmatprep.subr.mxu0 %v1923
    %1939 = vmatpush1.xpose.msra.mxu0 %v1922
    %1940 = vmatprep.subr.mxu0 0.0
    %1941 = vmatpush1.xpose.msra.mxu0 0.0
    %1942 = vmatprep.subr.mxu0 0.0
    %1943 = vmatpush1.xpose.msra.mxu0 0.0
    %1944 = vmatprep.subr.mxu0 0.0
    %1945 = vmatpush1.xpose.msra.mxu0 0.0
    %1946 = vmatprep.subr.mxu0 0.0
    %1947 = vmatpush1.xpose.msra.mxu0 0.0
    %1948 = vmatprep.subr.mxu0 0.0
    %1949 = vmatpush1.xpose.msra.mxu0 0.0
    %1950 = vmatprep.subr.mxu0 0.0
    %1951 = vmatpush1.xpose.msra.mxu0 0.0
    %1952 = vmatprep.subr.mxu0 0.0
    %1953 = vmatpush1.xpose.msra.mxu0 0.0
    %1954 = vmatprep.subr.mxu0 0.0
    %1955 = vmatpush1.xpose.msra.mxu0 0.0
    %1956 = vmatprep.subr.mxu0 0.0
    %1957 = vmatpush1.xpose.msra.mxu0 0.0
    %1958 = vmatprep.subr.mxu0 0.0
    %1959 = vmatpush1.xpose.msra.mxu0 0.0
    %1960 = vmatprep.subr.mxu0 0.0
    %1961 = vmatpush1.xpose.msra.mxu0 0.0
    %1962 = vmatprep.subr.mxu0 0.0
    %1963 = vmatpush1.xpose.msra.mxu0 0.0
    %1964 = vmatprep.subr.mxu0 0.0
    %1965 = vmatpush1.xpose.msra.mxu0 0.0
    %1966 = vmatprep.subr.mxu0 0.0
    %1967 = vmatpush1.xpose.msra.mxu0 0.0
    %1968 = vmatprep.subr.mxu0 0.0
    %1969 = vmatpush1.xpose.msra.mxu0 0.0
    %1970 = vmatprep.subr.mxu0 0.0
    %1971 = vmatpush1.xpose.msra.mxu0 0.0
    %1972 = vmatprep.subr.mxu0 0.0
    %1973 = vmatpush1.xpose.msra.mxu0 0.0
    %1974 = vmatprep.subr.mxu0 0.0
    %1975 = vmatpush1.xpose.msra.mxu0 0.0
    %1976 = vmatprep.subr.mxu0 0.0
    %1977 = vmatpush1.xpose.msra.mxu0 0.0
    %1978 = vmatprep.subr.mxu0 0.0
    %1979 = vmatpush1.xpose.msra.mxu0 0.0
    %1980 = vmatprep.subr.mxu0 0.0
    %1981 = vmatpush1.xpose.msra.mxu0 0.0
    %1982 = vmatprep.subr.mxu0 0.0
    %1983 = vmatpush1.xpose.msra.mxu0 0.0
    %1984 = vmatprep.subr.mxu0 0.0
    %1985 = vmatpush1.xpose.msra.mxu0 0.0
    %1986 = vmatprep.subr.mxu0 0.0
    %1987 = vmatpush1.xpose.msra.mxu0 0.0
    %1988 = vmatprep.mubr.f32.mxu0 %v1909
    %1989 = vmatmul.mubr.f32.gmra.mrb[0].mxu0 %v1908
    %v1990 = vpop.f32.mrb[0].mxu0
    %v1991 = vadd.f32 0.0, %v1990
    %v1992 = vpop.f32.mrb[0].mxu0
    %1993 = vmatprep.mubr.f32.mxu0 %v1911
    %1994 = vmatmul.mubr.f32.gmra.mrb[0].mxu0 %v1910
    %v1995 = vpop.f32.mrb[0].mxu0
    %v1996 = vadd.f32 0.0, %v1995
    %v1997 = vpop.f32.mrb[0].mxu0
    %1998 = vmatprep.mubr.f32.mxu0 %v1913
    %1999 = vmatmul.mubr.f32.gmra.mrb[0].mxu0 %v1912
    %v2000 = vpop.f32.mrb[0].mxu0
    %v2001 = vadd.f32 0.0, %v2000
    %v2002 = vpop.f32.mrb[0].mxu0
    %2003 = vmatprep.mubr.f32.mxu0 %v1915
    %2004 = vmatmul.mubr.f32.gmra.mrb[0].mxu0 %v1914
    %v2005 = vpop.f32.mrb[0].mxu0
    %v2006 = vadd.f32 0.0, %v2005
    %v2007 = vpop.f32.mrb[0].mxu0
    %2008 = vmatprep.mubr.f32.mxu0 %v1917
    %2009 = vmatmul.mubr.f32.gmra.mrb[0].mxu0 %v1916
    %v2010 = vpop.f32.mrb[0].mxu0
    %v2011 = vadd.f32 0.0, %v2010
    %v2012 = vpop.f32.mrb[0].mxu0
    %2013 = vmatprep.mubr.f32.mxu0 %v1919
    %2014 = vmatmul.mubr.f32.gmra.mrb[0].mxu0 %v1918
    %v2015 = vpop.f32.mrb[0].mxu0
    %v2016 = vadd.f32 0.0, %v2015
    %v2017 = vpop.f32.mrb[0].mxu0
    %2018 = vmatprep.mubr.f32.mxu0 %v1921
    %2019 = vmatmul.mubr.f32.gmra.mrb[0].mxu0 %v1920
    %v2020 = vpop.f32.mrb[0].mxu0
    %v2021 = vadd.f32 0.0, %v2020
    %v2022 = vpop.f32.mrb[0].mxu0
    %2023 = vmatprep.mubr.f32.mxu0 %v1923
    %2024 = vmatmul.mubr.f32.gmra.mrb[0].mxu0 %v1922
    %v2025 = vpop.f32.mrb[0].mxu0
    %v2026 = vadd.f32 0.0, %v2025
    %v2027 = vpop.f32.mrb[0].mxu0
    %2028 = vdwg.mxu0
    %v2029 = vadd.f32 %v1870, %v1991
    %v2030 = vadd.f32 %v1875, %v1996
    %v2031 = vadd.f32 %v1880, %v2001
    %v2032 = vadd.f32 %v1885, %v2006
    %v2033 = vadd.f32 %v1890, %v2011
    %v2034 = vadd.f32 %v1895, %v2016
    %v2035 = vadd.f32 %v1900, %v2021
    %v2036 = vadd.f32 %v1905, %v2026
    %v2037 = vsub.f32 %v1610, %v1658
    %v2038 = vsub.f32 %v1611, %v1658
    %v2039 = vsub.f32 %v1612, %v1659
    %v2040 = vsub.f32 %v1613, %v1659
    %v2041 = vsub.f32 %v1614, %v1660
    %v2042 = vsub.f32 %v1615, %v1660
    %v2043 = vsub.f32 %v1616, %v1661
    %v2044 = vsub.f32 %v1617, %v1661
    %v2045 = vsub.f32 %v1618, %v1662
    %v2046 = vsub.f32 %v1619, %v1662
    %v2047 = vsub.f32 %v1620, %v1663
    %v2048 = vsub.f32 %v1621, %v1663
    %v2049 = vsub.f32 %v1622, %v1664
    %v2050 = vsub.f32 %v1623, %v1664
    %v2051 = vsub.f32 %v1624, %v1665
    %v2052 = vsub.f32 %v1625, %v1665
    %2053 = vmatprep.subr.mxu0 %v2038
    %2054 = vmatpush1.xpose.msra.mxu0 %v2037
    %2055 = vmatprep.subr.mxu0 %v2040
    %2056 = vmatpush1.xpose.msra.mxu0 %v2039
    %2057 = vmatprep.subr.mxu0 %v2042
    %2058 = vmatpush1.xpose.msra.mxu0 %v2041
    %2059 = vmatprep.subr.mxu0 %v2044
    %2060 = vmatpush1.xpose.msra.mxu0 %v2043
    %2061 = vmatprep.subr.mxu0 %v2046
    %2062 = vmatpush1.xpose.msra.mxu0 %v2045
    %2063 = vmatprep.subr.mxu0 %v2048
    %2064 = vmatpush1.xpose.msra.mxu0 %v2047
    %2065 = vmatprep.subr.mxu0 %v2050
    %2066 = vmatpush1.xpose.msra.mxu0 %v2049
    %2067 = vmatprep.subr.mxu0 %v2052
    %2068 = vmatpush1.xpose.msra.mxu0 %v2051
    %2069 = vmatprep.subr.mxu0 0.0
    %2070 = vmatpush1.xpose.msra.mxu0 0.0
    %2071 = vmatprep.subr.mxu0 0.0
    %2072 = vmatpush1.xpose.msra.mxu0 0.0
    %2073 = vmatprep.subr.mxu0 0.0
    %2074 = vmatpush1.xpose.msra.mxu0 0.0
    %2075 = vmatprep.subr.mxu0 0.0
    %2076 = vmatpush1.xpose.msra.mxu0 0.0
    %2077 = vmatprep.subr.mxu0 0.0
    %2078 = vmatpush1.xpose.msra.mxu0 0.0
    %2079 = vmatprep.subr.mxu0 0.0
    %2080 = vmatpush1.xpose.msra.mxu0 0.0
    %2081 = vmatprep.subr.mxu0 0.0
    %2082 = vmatpush1.xpose.msra.mxu0 0.0
    %2083 = vmatprep.subr.mxu0 0.0
    %2084 = vmatpush1.xpose.msra.mxu0 0.0
    %2085 = vmatprep.subr.mxu0 0.0
    %2086 = vmatpush1.xpose.msra.mxu0 0.0
    %2087 = vmatprep.subr.mxu0 0.0
    %2088 = vmatpush1.xpose.msra.mxu0 0.0
    %2089 = vmatprep.subr.mxu0 0.0
    %2090 = vmatpush1.xpose.msra.mxu0 0.0
    %2091 = vmatprep.subr.mxu0 0.0
    %2092 = vmatpush1.xpose.msra.mxu0 0.0
    %2093 = vmatprep.subr.mxu0 0.0
    %2094 = vmatpush1.xpose.msra.mxu0 0.0
    %2095 = vmatprep.subr.mxu0 0.0
    %2096 = vmatpush1.xpose.msra.mxu0 0.0
    %2097 = vmatprep.subr.mxu0 0.0
    %2098 = vmatpush1.xpose.msra.mxu0 0.0
    %2099 = vmatprep.subr.mxu0 0.0
    %2100 = vmatpush1.xpose.msra.mxu0 0.0
    %2101 = vmatprep.subr.mxu0 0.0
    %2102 = vmatpush1.xpose.msra.mxu0 0.0
    %2103 = vmatprep.subr.mxu0 0.0
    %2104 = vmatpush1.xpose.msra.mxu0 0.0
    %2105 = vmatprep.subr.mxu0 0.0
    %2106 = vmatpush1.xpose.msra.mxu0 0.0
    %2107 = vmatprep.subr.mxu0 0.0
    %2108 = vmatpush1.xpose.msra.mxu0 0.0
    %2109 = vmatprep.subr.mxu0 0.0
    %2110 = vmatpush1.xpose.msra.mxu0 0.0
    %2111 = vmatprep.subr.mxu0 0.0
    %2112 = vmatpush1.xpose.msra.mxu0 0.0
    %2113 = vmatprep.subr.mxu0 0.0
    %2114 = vmatpush1.xpose.msra.mxu0 0.0
    %2115 = vmatprep.subr.mxu0 0.0
    %2116 = vmatpush1.xpose.msra.mxu0 0.0
    %2117 = vmatprep.mubr.f32.mxu0 %v2038
    %2118 = vmatmul.mubr.f32.gmra.mrb[0].mxu0 %v2037
    %v2119 = vpop.f32.mrb[0].mxu0
    %v2120 = vadd.f32 0.0, %v2119
    %v2121 = vpop.f32.mrb[0].mxu0
    %2122 = vmatprep.mubr.f32.mxu0 %v2040
    %2123 = vmatmul.mubr.f32.gmra.mrb[0].mxu0 %v2039
    %v2124 = vpop.f32.mrb[0].mxu0
    %v2125 = vadd.f32 0.0, %v2124
    %v2126 = vpop.f32.mrb[0].mxu0
    %2127 = vmatprep.mubr.f32.mxu0 %v2042
    %2128 = vmatmul.mubr.f32.gmra.mrb[0].mxu0 %v2041
    %v2129 = vpop.f32.mrb[0].mxu0
    %v2130 = vadd.f32 0.0, %v2129
    %v2131 = vpop.f32.mrb[0].mxu0
    %2132 = vmatprep.mubr.f32.mxu0 %v2044
    %2133 = vmatmul.mubr.f32.gmra.mrb[0].mxu0 %v2043
    %v2134 = vpop.f32.mrb[0].mxu0
    %v2135 = vadd.f32 0.0, %v2134
    %v2136 = vpop.f32.mrb[0].mxu0
    %2137 = vmatprep.mubr.f32.mxu0 %v2046
    %2138 = vmatmul.mubr.f32.gmra.mrb[0].mxu0 %v2045
    %v2139 = vpop.f32.mrb[0].mxu0
    %v2140 = vadd.f32 0.0, %v2139
    %v2141 = vpop.f32.mrb[0].mxu0
    %2142 = vmatprep.mubr.f32.mxu0 %v2048
    %2143 = vmatmul.mubr.f32.gmra.mrb[0].mxu0 %v2047
    %v2144 = vpop.f32.mrb[0].mxu0
    %v2145 = vadd.f32 0.0, %v2144
    %v2146 = vpop.f32.mrb[0].mxu0
    %2147 = vmatprep.mubr.f32.mxu0 %v2050
    %2148 = vmatmul.mubr.f32.gmra.mrb[0].mxu0 %v2049
    %v2149 = vpop.f32.mrb[0].mxu0
    %v2150 = vadd.f32 0.0, %v2149
    %v2151 = vpop.f32.mrb[0].mxu0
    %2152 = vmatprep.mubr.f32.mxu0 %v2052
    %2153 = vmatmul.mubr.f32.gmra.mrb[0].mxu0 %v2051
    %v2154 = vpop.f32.mrb[0].mxu0
    %v2155 = vadd.f32 0.0, %v2154
    %v2156 = vpop.f32.mrb[0].mxu0
    %2157 = vdwg.mxu0
    %v2158 = vadd.f32 %v2029, %v2120
    %v2159 = vadd.f32 %v2030, %v2125
    %v2160 = vadd.f32 %v2031, %v2130
    %v2161 = vadd.f32 %v2032, %v2135
    %v2162 = vadd.f32 %v2033, %v2140
    %v2163 = vadd.f32 %v2034, %v2145
    %v2164 = vadd.f32 %v2035, %v2150
    %v2165 = vadd.f32 %v2036, %v2155
    %v2166 = vmul.f32 %v2158, 0.0009775171
    %v2167 = vmul.f32 %v2159, 0.0009775171
    %v2168 = vmul.f32 %v2160, 0.0009775171
    %v2169 = vmul.f32 %v2161, 0.0009775171
    %v2170 = vmul.f32 %v2162, 0.0009775171
    %v2171 = vmul.f32 %v2163, 0.0009775171
    %v2172 = vmul.f32 %v2164, 0.0009775171
    %v2173 = vmul.f32 %v2165, 0.0009775171
    %2174 = vst.msk [vmem:[%s1 + $0x80] sm:$0xff] %vm733, %v2166
    %2175 = vst.msk [vmem:[%s1 + $0x88] sm:$0xff] %vm733, %v2167
    %2176 = vst.msk [vmem:[%s1 + $0x90] sm:$0xff] %vm733, %v2168
    %2177 = vst.msk [vmem:[%s1 + $0x98] sm:$0xff] %vm733, %v2169
    %2178 = vst.msk [vmem:[%s1 + $0xa0] sm:$0xff] %vm733, %v2170
    %2179 = vst.msk [vmem:[%s1 + $0xa8] sm:$0xff] %vm733, %v2171
    %2180 = vst.msk [vmem:[%s1 + $0xb0] sm:$0xff] %vm733, %v2172
    %2181 = vst.msk [vmem:[%s1 + $0xb8] sm:$0xff] %vm733, %v2173
    // Predicated region
    $region10: #{tpu_custom_call.1} parent=1 // pred_check
      _
    $region11: #{tpu_custom_call.1} parent=1 // pred_check_branch
      %2183 = sbr.rel (0) target = $region13
    $region12: #{tpu_custom_call.1} parent=1 // pred_region
      _
    $region13: #{tpu_custom_call.1} parent=1 // pred_fallthru
      _
    // Predicated region
    $region14: #{tpu_custom_call.1} parent=1 // pred_check
      _
    $region15: #{tpu_custom_call.1} parent=1 // pred_check_branch
      %2185 = sbr.rel (0) target = $region17
    $region16: #{tpu_custom_call.1} parent=1 // pred_region
      _
    $region17: #{tpu_custom_call.1} parent=1 // pred_fallthru
      _
    %2186 = vsyncpa [#allocation3], 1

</llo_original>
